<compile_context>
chip_gen: v7x
topology: tpu7x:2x2x1
jax: 0.10.0
libtpu: 0.0.40
codegen_flags: <defaults>
</compile_context>

<pallas_src>
import functools

import jax
import jax.numpy as jnp
from jax.experimental import pallas as pl
from jax.experimental.pallas import tpu as pltpu


def _conv_gemm_kernel(x_ref, w_ref, *rest, KH, KW, TH, Wo, stride,
                      apply_relu, has_bias):
    """One (batch-block, output-row-block, Cout-block) tile per grid step.

    x_ref: (B, TH_in, Wp, Cin)   padded input rows incl. (KH-1)-row halo
    w_ref: (KH*KW*Cin, CB)       im2col-ordered weight slab, lane-dense CB (=128)
    b_ref: (1, CB)               optional f32 bias (only when has_bias)
    o_ref: (B, TH, Wo, CB)
    """
    if has_bias:
        b_ref, o_ref = rest
    else:
        (o_ref,) = rest

    B = x_ref.shape[0]
    Cin = x_ref.shape[-1]

    # im2col: gather the KH*KW taps straight from the ref (no full-tile load) and
    # fold them into the contraction dim -> a single MXU matmul with K = KH*KW*Cin.
    taps = []
    for kh in range(KH):
        for kw in range(KW):
            if stride == 1:
                tap = x_ref[:, kh:kh + TH, kw:kw + Wo, :]
            else:
                # TODO(synk): for stride>1 prefer a wrapper-side space-to-depth so
                # the kernel only sees unit-stride windows (TSR never uses stride>1).
                tap = x_ref[:, kh:kh + (TH - 1) * stride + 1,
                            kw:kw + (Wo - 1) * stride + 1, :]
                tap = tap[:, ::stride, ::stride, :]
            taps.append(tap)
    patches = jnp.concatenate(taps, axis=-1)            # (B, TH, Wo, KH*KW*Cin)

    m = B * TH * Wo
    k = KH * KW * Cin
    acc = jnp.dot(patches.reshape(m, k), w_ref[...],
                  preferred_element_type=jnp.float32)    # (m, CB), f32 accumulate
    if has_bias:
        acc = acc + b_ref[...].astype(jnp.float32)       # (1, CB) broadcast
    if apply_relu:
        acc = jnp.maximum(acc, 0.0)                      # epilogue stays in f32
    o_ref[...] = acc.reshape(B, TH, Wo, o_ref.shape[-1]).astype(o_ref.dtype)


def _divisors(n):
    return [d for d in range(1, n + 1) if n % d == 0]


def _pick_tiles(N, Ho, Wo, Wp, Cin, KH, stride, in_itemsize, out_itemsize,
                cb=128, vmem_budget=8 * 2**20, target_rows=1024):
    """Pick (batch block, output-row block) so each grid step has a large matmul M
    dim while the per-buffer working set stays well inside VMEM (v7x: 64 MiB)."""
    best = None
    for th in _divisors(Ho):
        th_in = (th - 1) * stride + KH
        for b in _divisors(N):
            rows = b * th * Wo
            fp = (b * th_in * Wp * Cin * in_itemsize
                  + b * th * Wo * cb * out_itemsize)
            score = (fp > vmem_budget, abs(rows - target_rows), fp)
            if best is None or score < best[0]:
                best = (score, b, th)
    return best[1], best[2]


def basic_conv(x_nchw, w_oihw, bias=None, *, stride=1, padding=0, relu=True,
               compute_dtype=None):
    """Forward pass of BasicConv: [ReLU](Conv2d(x) [+ bias]).  bn=False only."""
    N, Cin, H, W = x_nchw.shape
    Cout, Cin_w, KH, KW = w_oihw.shape
    assert Cin == Cin_w, "groups != 1 not supported in this kernel"
    # TODO(synk): groups>1, dilation>1 and the bn=True branch of BasicConv are not
    # implemented (module defaults: groups=1, dilation=1, bn=False).

    out_dtype = x_nchw.dtype
    cdt = jnp.dtype(compute_dtype) if compute_dtype is not None else jnp.dtype(out_dtype)

    # ---- layout plumbing (XLA glue): NCHW -> NHWC, spatial zero-pad -------------
    x = jnp.transpose(x_nchw, (0, 2, 3, 1)).astype(cdt)
    x = jnp.pad(x, ((0, 0), (padding, padding), (padding, padding), (0, 0)))
    # TODO(synk): fuse the zero-pad into the kernel (mask halo rows) to drop the
    # extra HBM round-trip of the activation tensor.

    Hp, Wp = H + 2 * padding, W + 2 * padding
    Ho = (Hp - KH) // stride + 1
    Wo = (Wp - KW) // stride + 1

    # Weights: OIHW -> im2col-ordered (KH*KW*Cin, Cout), zero-padded to lane-dense
    # Cout (multiple of 128) so output stores are unmasked and the MXU N dim is full.
    Kdim = KH * KW * Cin
    CB = 128
    Cp = pl.cdiv(Cout, CB) * CB
    w2d = jnp.transpose(w_oihw, (2, 3, 1, 0)).reshape(Kdim, Cout)
    w2d = jnp.pad(w2d, ((0, 0), (0, Cp - Cout))).astype(cdt)

    has_bias = bias is not None
    if has_bias:
        b2d = jnp.pad(bias.astype(jnp.float32), (0, Cp - Cout)).reshape(1, Cp)

    # ---- tile selection (batch block x output-row block) ------------------------
    B_blk, TH = _pick_tiles(N, Ho, Wo, Wp, Cin, KH, stride,
                            jnp.dtype(cdt).itemsize, jnp.dtype(out_dtype).itemsize, CB)
    TH_in = (TH - 1) * stride + KH
    nRB = Ho // TH

    # Row-blocked view of the padded input with a (KH-1)-row halo so each grid step
    # only pulls the rows it needs (bounded VMEM; duplicates only the halo rows).
    xb = jnp.stack([x[:, j * TH * stride:j * TH * stride + TH_in]
                    for j in range(nRB)], axis=1)        # (N, nRB, TH_in, Wp, Cin)

    grid = (N // B_blk, nRB, Cp // CB)

    kernel = functools.partial(
        _conv_gemm_kernel, KH=KH, KW=KW, TH=TH, Wo=Wo,
        stride=stride, apply_relu=relu, has_bias=has_bias)

    in_specs = [
        pl.BlockSpec((B_blk, None, TH_in, Wp, Cin),
                     lambda nb, rb, cb: (nb, rb, 0, 0, 0)),
        pl.BlockSpec((Kdim, CB), lambda nb, rb, cb: (0, cb)),
    ]
    args = [xb, w2d]
    if has_bias:
        in_specs.append(pl.BlockSpec((1, CB), lambda nb, rb, cb: (0, cb)))
        args.append(b2d)

    # Explicit VMEM limit: double-buffered blocks + headroom (safe on v7x's 64 MiB).
    in_b = B_blk * TH_in * Wp * Cin * jnp.dtype(cdt).itemsize
    w_b = Kdim * CB * jnp.dtype(cdt).itemsize
    o_b = B_blk * TH * Wo * CB * jnp.dtype(out_dtype).itemsize
    need = 2 * (in_b + w_b + o_b + (CB * 4 if has_bias else 0))
    vmem_limit = int(min(48 * 2**20, max(16 * 2**20, 2 * need)))

    out = pl.pallas_call(
        kernel,
        out_shape=jax.ShapeDtypeStruct((N, Ho, Wo, Cp), out_dtype),
        grid=grid,
        in_specs=in_specs,
        out_specs=pl.BlockSpec((B_blk, TH, Wo, CB),
                               lambda nb, rb, cb: (nb, rb, 0, cb)),
        compiler_params=pltpu.CompilerParams(
            dimension_semantics=("parallel", "parallel", "parallel"),
            vmem_limit_bytes=vmem_limit),
    )(*args)

    out = out[..., :Cout]                        # drop lane padding
    return jnp.transpose(out, (0, 3, 1, 2))      # back to NCHW


if __name__ == "__main__":
    # BasicConv(in_feature=4, out_feature=8, kernel_size=3, stride=1,
    #           padding=1, relu=True, bn=False, bias=False)
    N, Cin, H, W = 2, 4, 16, 16
    Cout, K = 8, 3
    stride, padding = 1, 1

    key = jax.random.PRNGKey(0)
    kx, kw, kb = jax.random.split(key, 3)
    x = jax.random.normal(kx, (N, Cin, H, W), dtype=jnp.float32)
    w = jax.random.normal(kw, (Cout, Cin, K, K), dtype=jnp.float32) * 0.1
    b = jax.random.normal(kb, (Cout,), dtype=jnp.float32) * 0.1

    # --- 1) BasicConv defaults: f32 compute, ReLU, no bias ----------------------
    y = basic_conv(x, w, stride=stride, padding=padding, relu=True)
    y = jax.block_until_ready(y)
    ref = jax.lax.conv_general_dilated(
        x, w, window_strides=(stride, stride),
        padding=[(padding, padding), (padding, padding)],
        dimension_numbers=("NCHW", "OIHW", "NCHW"))
    ref = jnp.maximum(ref, 0.0)
    assert y.shape == ref.shape
    assert jnp.allclose(y, ref, rtol=1e-3, atol=1e-3), \
        float(jnp.max(jnp.abs(y - ref)))

    # --- 2) bf16 MXU path (halves HBM/VMEM traffic), bias, no ReLU --------------
    y2 = basic_conv(x, w, bias=b, stride=stride, padding=padding, relu=False,
                    compute_dtype=jnp.bfloat16)
    y2 = jax.block_until_ready(y2)
    ref2 = jax.lax.conv_general_dilated(
        x.astype(jnp.bfloat16), w.astype(jnp.bfloat16),
        window_strides=(stride, stride),
        padding=[(padding, padding), (padding, padding)],
        dimension_numbers=("NCHW", "OIHW", "NCHW"),
        preferred_element_type=jnp.float32)
    ref2 = ref2 + b.reshape(1, Cout, 1, 1)
    assert y2.shape == ref2.shape
    assert jnp.allclose(y2, ref2, rtol=1e-2, atol=1e-2), \
        float(jnp.max(jnp.abs(y2 - ref2)))

    print("KERNEL_OK")
</pallas_src>

<mosaic_0001>
module attributes {stable_mosaic.version = 11 : i64} {
  func.func @_conv_gemm_kernel(%arg0: i32, %arg1: i32, %arg2: i32, %arg3: memref<2x1x18x18x4xf32, #tpu.memory_space<vmem>>, %arg4: memref<36x128xf32, #tpu.memory_space<vmem>>, %arg5: memref<2x16x16x128xf32, #tpu.memory_space<vmem>>) attributes {dimension_semantics = [#tpu.dimension_semantics<parallel>, #tpu.dimension_semantics<parallel>, #tpu.dimension_semantics<parallel>], iteration_bounds = array<i64: 1, 1, 1>, scalar_prefetch = 0 : i64, scratch_operands = 0 : i64, tpu.core_type = #tpu.core_type<tc>, window_params = [{transform_indices = @transform_0, window_bounds = array<i64: 2, 1, 18, 18, 4>}, {transform_indices = @transform_1, window_bounds = array<i64: 36, 128>}, {transform_indices = @transform_2, window_bounds = array<i64: 2, 16, 16, 128>}]} {
    %c0 = arith.constant 0 : index
    %c0_0 = arith.constant 0 : index
    %c0_1 = arith.constant 0 : index
    %c0_2 = arith.constant 0 : index
    %c0_3 = arith.constant 0 : index
    %0 = vector.load %arg3[%c0, %c0_0, %c0_1, %c0_2, %c0_3] : memref<2x1x18x18x4xf32, #tpu.memory_space<vmem>>, vector<2x1x16x16x4xf32>
    %1 = vector.shape_cast %0 : vector<2x1x16x16x4xf32> to vector<2x16x16x4xf32>
    %c0_4 = arith.constant 0 : index
    %c0_5 = arith.constant 0 : index
    %c0_6 = arith.constant 0 : index
    %c1 = arith.constant 1 : index
    %c0_7 = arith.constant 0 : index
    %2 = vector.load %arg3[%c0_4, %c0_5, %c0_6, %c1, %c0_7] : memref<2x1x18x18x4xf32, #tpu.memory_space<vmem>>, vector<2x1x16x16x4xf32>
    %3 = vector.shape_cast %2 : vector<2x1x16x16x4xf32> to vector<2x16x16x4xf32>
    %c0_8 = arith.constant 0 : index
    %c0_9 = arith.constant 0 : index
    %c0_10 = arith.constant 0 : index
    %c2 = arith.constant 2 : index
    %c0_11 = arith.constant 0 : index
    %4 = vector.load %arg3[%c0_8, %c0_9, %c0_10, %c2, %c0_11] : memref<2x1x18x18x4xf32, #tpu.memory_space<vmem>>, vector<2x1x16x16x4xf32>
    %5 = vector.shape_cast %4 : vector<2x1x16x16x4xf32> to vector<2x16x16x4xf32>
    %c0_12 = arith.constant 0 : index
    %c0_13 = arith.constant 0 : index
    %c1_14 = arith.constant 1 : index
    %c0_15 = arith.constant 0 : index
    %c0_16 = arith.constant 0 : index
    %6 = vector.load %arg3[%c0_12, %c0_13, %c1_14, %c0_15, %c0_16] : memref<2x1x18x18x4xf32, #tpu.memory_space<vmem>>, vector<2x1x16x16x4xf32>
    %7 = vector.shape_cast %6 : vector<2x1x16x16x4xf32> to vector<2x16x16x4xf32>
    %c0_17 = arith.constant 0 : index
    %c0_18 = arith.constant 0 : index
    %c1_19 = arith.constant 1 : index
    %c1_20 = arith.constant 1 : index
    %c0_21 = arith.constant 0 : index
    %8 = vector.load %arg3[%c0_17, %c0_18, %c1_19, %c1_20, %c0_21] : memref<2x1x18x18x4xf32, #tpu.memory_space<vmem>>, vector<2x1x16x16x4xf32>
    %9 = vector.shape_cast %8 : vector<2x1x16x16x4xf32> to vector<2x16x16x4xf32>
    %c0_22 = arith.constant 0 : index
    %c0_23 = arith.constant 0 : index
    %c1_24 = arith.constant 1 : index
    %c2_25 = arith.constant 2 : index
    %c0_26 = arith.constant 0 : index
    %10 = vector.load %arg3[%c0_22, %c0_23, %c1_24, %c2_25, %c0_26] : memref<2x1x18x18x4xf32, #tpu.memory_space<vmem>>, vector<2x1x16x16x4xf32>
    %11 = vector.shape_cast %10 : vector<2x1x16x16x4xf32> to vector<2x16x16x4xf32>
    %c0_27 = arith.constant 0 : index
    %c0_28 = arith.constant 0 : index
    %c2_29 = arith.constant 2 : index
    %c0_30 = arith.constant 0 : index
    %c0_31 = arith.constant 0 : index
    %12 = vector.load %arg3[%c0_27, %c0_28, %c2_29, %c0_30, %c0_31] : memref<2x1x18x18x4xf32, #tpu.memory_space<vmem>>, vector<2x1x16x16x4xf32>
    %13 = vector.shape_cast %12 : vector<2x1x16x16x4xf32> to vector<2x16x16x4xf32>
    %c0_32 = arith.constant 0 : index
    %c0_33 = arith.constant 0 : index
    %c2_34 = arith.constant 2 : index
    %c1_35 = arith.constant 1 : index
    %c0_36 = arith.constant 0 : index
    %14 = vector.load %arg3[%c0_32, %c0_33, %c2_34, %c1_35, %c0_36] : memref<2x1x18x18x4xf32, #tpu.memory_space<vmem>>, vector<2x1x16x16x4xf32>
    %15 = vector.shape_cast %14 : vector<2x1x16x16x4xf32> to vector<2x16x16x4xf32>
    %c0_37 = arith.constant 0 : index
    %c0_38 = arith.constant 0 : index
    %c2_39 = arith.constant 2 : index
    %c2_40 = arith.constant 2 : index
    %c0_41 = arith.constant 0 : index
    %16 = vector.load %arg3[%c0_37, %c0_38, %c2_39, %c2_40, %c0_41] : memref<2x1x18x18x4xf32, #tpu.memory_space<vmem>>, vector<2x1x16x16x4xf32>
    %17 = vector.shape_cast %16 : vector<2x1x16x16x4xf32> to vector<2x16x16x4xf32>
    %18 = tpu.concatenate %1, %3, %5, %7, %9, %11, %13, %15, %17 in 3 : vector<2x16x16x4xf32>, vector<2x16x16x4xf32>, vector<2x16x16x4xf32>, vector<2x16x16x4xf32>, vector<2x16x16x4xf32>, vector<2x16x16x4xf32>, vector<2x16x16x4xf32>, vector<2x16x16x4xf32>, vector<2x16x16x4xf32> -> vector<2x16x16x36xf32>
    %19 = vector.shape_cast %18 : vector<2x16x16x36xf32> to vector<512x36xf32>
    %c0_42 = arith.constant 0 : index
    %c0_43 = arith.constant 0 : index
    %20 = vector.load %arg4[%c0_42, %c0_43] : memref<36x128xf32, #tpu.memory_space<vmem>>, vector<36x128xf32>
    %cst = arith.constant dense<0.000000e+00> : vector<512x128xf32>
    %21 = tpu.matmul %19, %20, %cst {dimension_numbers = #tpu.dot_dimension_numbers<[1], [0], [0], [1], [0, 0, 1, 1], [], []>} : vector<512x36xf32>, vector<36x128xf32>, vector<512x128xf32> -> vector<512x128xf32>
    %cst_44 = arith.constant 0.000000e+00 : f32
    %22 = vector.broadcast %cst_44 : f32 to vector<512x128xf32>
    %23 = arith.maximumf %21, %22 : vector<512x128xf32>
    %24 = vector.shape_cast %23 : vector<512x128xf32> to vector<2x16x16x128xf32>
    %c0_45 = arith.constant 0 : index
    %c0_46 = arith.constant 0 : index
    %c0_47 = arith.constant 0 : index
    %c0_48 = arith.constant 0 : index
    %25 = vector.load %arg5[%c0_45, %c0_46, %c0_47, %c0_48] : memref<2x16x16x128xf32, #tpu.memory_space<vmem>>, vector<2x16x16x128xf32>
    tpu.vector_store %arg5[%c0_45, %c0_46, %c0_47, %c0_48], %24 {strides = array<i32>} : memref<2x16x16x128xf32, #tpu.memory_space<vmem>>, vector<2x16x16x128xf32>,
    return
  }
  func.func @transform_0(%arg0: i32, %arg1: i32, %arg2: i32) -> (i32, i32, i32, i32, i32) {
    %c0_i32 = arith.constant 0 : i32
    %c0_i32_0 = arith.constant 0 : i32
    %c0_i32_1 = arith.constant 0 : i32
    %c0_i32_2 = arith.constant 0 : i32
    return %arg0, %arg1, %c0_i32, %c0_i32_0, %c0_i32_1 : i32, i32, i32, i32, i32
  }
  func.func @transform_1(%arg0: i32, %arg1: i32, %arg2: i32) -> (i32, i32) {
    %c0_i32 = arith.constant 0 : i32
    %c0_i32_0 = arith.constant 0 : i32
    return %c0_i32, %arg2 : i32, i32
  }
  func.func @transform_2(%arg0: i32, %arg1: i32, %arg2: i32) -> (i32, i32, i32, i32) {
    %c0_i32 = arith.constant 0 : i32
    %c0_i32_0 = arith.constant 0 : i32
    return %arg0, %arg1, %c0_i32, %arg2 : i32, i32, i32, i32
  }
}

</mosaic_0001>

<llo_original>
// kernel: tpu_custom_call.1
$region0: #{tpu_custom_call.1}
  #allocation0 [shape = 'u32[]', space=smem, size = 0x4, offset = 0x4, fixed_abs, tag = 'smem constant byte address 0x4 - core index']
  #allocation1 [shape = 'u32[144,128]{1,0:T(1,128)}', space=vmem, size = 0x12000, scoped, tag = 'internal scratch']
  %s0 = inlined_call_operand.vmem [shape: f32[2,1,18,18,4], index: 0, kind: input, shape index: {}]
  %s1 = inlined_call_operand.vmem [shape: f32[36,128], index: 1, kind: input, shape index: {}]
  %s2 = inlined_call_operand.hbm [shape: f32[2,16,16,128], index: 2, kind: output, shape index: {}]
  %s3 = sld [smem:[#allocation0]]
  $region18: #{tpu_custom_call.1} parent=0
    _
  %s5 = ssub.s32 1, %s3
  %s6 = scalar_select 0, %s5, %s3
  $region1: #{tpu_custom_call.1} parent=0
    #allocation2 [shape = 'u8[262144]{0}', space=vmem, size = 0x40000, scoped, tag = 'output window, operand 0, single buffered']
    #allocation3 [shape = 's32[1]{0}', space=sflag, size = 0x4, scoped, tag = 'scoped memory for tpu_custom_call.1']
    %7 = vsyncpa [#allocation3], 0
    // Predicated region
    $region2: #{tpu_custom_call.1} parent=1 // pred_check
      _
    $region3: #{tpu_custom_call.1} parent=1 // pred_check_branch
      %9 = sbr.rel (0) target = $region5
    $region4: #{tpu_custom_call.1} parent=1 // pred_region
      _
    $region5: #{tpu_custom_call.1} parent=1 // pred_fallthru
      _
    // Predicated region
    $region6: #{tpu_custom_call.1} parent=1 // pred_check
      _
    $region7: #{tpu_custom_call.1} parent=1 // pred_check_branch
      %11 = sbr.rel (0) target = $region9
    $region8: #{tpu_custom_call.1} parent=1 // pred_region
      _
    $region9: #{tpu_custom_call.1} parent=1 // pred_fallthru
      _
    %v12 = vld [vmem:[%s0] sm:$0xff]
    %v13 = vld [vmem:[%s0 + $0x8] sm:$0xff]
    %v14 = vld [vmem:[%s0 + $0x18] sm:$0xff]
    %v15 = vld [vmem:[%s0 + $0x20] sm:$0xff]
    %v16 = vld [vmem:[%s0 + $0x30] sm:$0xff]
    %v17 = vld [vmem:[%s0 + $0x38] sm:$0xff]
    %v18 = vld [vmem:[%s0 + $0x48] sm:$0xff]
    %v19 = vld [vmem:[%s0 + $0x50] sm:$0xff]
    %v20 = vld [vmem:[%s0 + $0x60] sm:$0xff]
    %v21 = vld [vmem:[%s0 + $0x68] sm:$0xff]
    %v22 = vld [vmem:[%s0 + $0x78] sm:$0xff]
    %v23 = vld [vmem:[%s0 + $0x80] sm:$0xff]
    %v24 = vld [vmem:[%s0 + $0x90] sm:$0xff]
    %v25 = vld [vmem:[%s0 + $0x98] sm:$0xff]
    %v26 = vld [vmem:[%s0 + $0xa8] sm:$0xff]
    %v27 = vld [vmem:[%s0 + $0xb0] sm:$0xff]
    %v28 = vld [vmem:[%s0 + $0xc0] sm:$0xff]
    %v29 = vld [vmem:[%s0 + $0xc8] sm:$0xff]
    %v30 = vld [vmem:[%s0 + $0xd8] sm:$0xff]
    %v31 = vld [vmem:[%s0 + $0xe0] sm:$0xff]
    %v32 = vld [vmem:[%s0 + $0xf0] sm:$0xff]
    %v33 = vld [vmem:[%s0 + $0xf8] sm:$0xff]
    %v34 = vld [vmem:[%s0 + $0x108] sm:$0xff]
    %v35 = vld [vmem:[%s0 + $0x110] sm:$0xff]
    %v36 = vld [vmem:[%s0 + $0x120] sm:$0xff]
    %v37 = vld [vmem:[%s0 + $0x128] sm:$0xff]
    %v38 = vld [vmem:[%s0 + $0x138] sm:$0xff]
    %v39 = vld [vmem:[%s0 + $0x140] sm:$0xff]
    %v40 = vld [vmem:[%s0 + $0x150] sm:$0xff]
    %v41 = vld [vmem:[%s0 + $0x158] sm:$0xff]
    %v42 = vld [vmem:[%s0 + $0x168] sm:$0xff]
    %v43 = vld [vmem:[%s0 + $0x170] sm:$0xff]
    %v44 = vld [vmem:[%s0 + $0x1b0] sm:$0xff]
    %v45 = vld [vmem:[%s0 + $0x1b8] sm:$0xff]
    %v46 = vld [vmem:[%s0 + $0x1c8] sm:$0xff]
    %v47 = vld [vmem:[%s0 + $0x1d0] sm:$0xff]
    %v48 = vld [vmem:[%s0 + $0x1e0] sm:$0xff]
    %v49 = vld [vmem:[%s0 + $0x1e8] sm:$0xff]
    %v50 = vld [vmem:[%s0 + $0x1f8] sm:$0xff]
    %v51 = vld [vmem:[%s0 + $0x200] sm:$0xff]
    %v52 = vld [vmem:[%s0 + $0x210] sm:$0xff]
    %v53 = vld [vmem:[%s0 + $0x218] sm:$0xff]
    %v54 = vld [vmem:[%s0 + $0x228] sm:$0xff]
    %v55 = vld [vmem:[%s0 + $0x230] sm:$0xff]
    %v56 = vld [vmem:[%s0 + $0x240] sm:$0xff]
    %v57 = vld [vmem:[%s0 + $0x248] sm:$0xff]
    %v58 = vld [vmem:[%s0 + $0x258] sm:$0xff]
    %v59 = vld [vmem:[%s0 + $0x260] sm:$0xff]
    %v60 = vld [vmem:[%s0 + $0x270] sm:$0xff]
    %v61 = vld [vmem:[%s0 + $0x278] sm:$0xff]
    %v62 = vld [vmem:[%s0 + $0x288] sm:$0xff]
    %v63 = vld [vmem:[%s0 + $0x290] sm:$0xff]
    %v64 = vld [vmem:[%s0 + $0x2a0] sm:$0xff]
    %v65 = vld [vmem:[%s0 + $0x2a8] sm:$0xff]
    %v66 = vld [vmem:[%s0 + $0x2b8] sm:$0xff]
    %v67 = vld [vmem:[%s0 + $0x2c0] sm:$0xff]
    %v68 = vld [vmem:[%s0 + $0x2d0] sm:$0xff]
    %v69 = vld [vmem:[%s0 + $0x2d8] sm:$0xff]
    %v70 = vld [vmem:[%s0 + $0x2e8] sm:$0xff]
    %v71 = vld [vmem:[%s0 + $0x2f0] sm:$0xff]
    %v72 = vld [vmem:[%s0 + $0x300] sm:$0xff]
    %v73 = vld [vmem:[%s0 + $0x308] sm:$0xff]
    %v74 = vld [vmem:[%s0 + $0x318] sm:$0xff]
    %v75 = vld [vmem:[%s0 + $0x320] sm:$0xff]
    %v76 = vld [vmem:[%s0 + $0x1] sm:$0xff]
    %v77 = vld [vmem:[%s0 + $0x9] sm:$0xff]
    %v78 = vld [vmem:[%s0 + $0x19] sm:$0xff]
    %v79 = vld [vmem:[%s0 + $0x21] sm:$0xff]
    %v80 = vld [vmem:[%s0 + $0x31] sm:$0xff]
    %v81 = vld [vmem:[%s0 + $0x39] sm:$0xff]
    %v82 = vld [vmem:[%s0 + $0x49] sm:$0xff]
    %v83 = vld [vmem:[%s0 + $0x51] sm:$0xff]
    %v84 = vld [vmem:[%s0 + $0x61] sm:$0xff]
    %v85 = vld [vmem:[%s0 + $0x69] sm:$0xff]
    %v86 = vld [vmem:[%s0 + $0x79] sm:$0xff]
    %v87 = vld [vmem:[%s0 + $0x81] sm:$0xff]
    %v88 = vld [vmem:[%s0 + $0x91] sm:$0xff]
    %v89 = vld [vmem:[%s0 + $0x99] sm:$0xff]
    %v90 = vld [vmem:[%s0 + $0xa9] sm:$0xff]
    %v91 = vld [vmem:[%s0 + $0xb1] sm:$0xff]
    %v92 = vld [vmem:[%s0 + $0xc1] sm:$0xff]
    %v93 = vld [vmem:[%s0 + $0xc9] sm:$0xff]
    %v94 = vld [vmem:[%s0 + $0xd9] sm:$0xff]
    %v95 = vld [vmem:[%s0 + $0xe1] sm:$0xff]
    %v96 = vld [vmem:[%s0 + $0xf1] sm:$0xff]
    %v97 = vld [vmem:[%s0 + $0xf9] sm:$0xff]
    %v98 = vld [vmem:[%s0 + $0x109] sm:$0xff]
    %v99 = vld [vmem:[%s0 + $0x111] sm:$0xff]
    %v100 = vld [vmem:[%s0 + $0x121] sm:$0xff]
    %v101 = vld [vmem:[%s0 + $0x129] sm:$0xff]
    %v102 = vld [vmem:[%s0 + $0x139] sm:$0xff]
    %v103 = vld [vmem:[%s0 + $0x141] sm:$0xff]
    %v104 = vld [vmem:[%s0 + $0x151] sm:$0xff]
    %v105 = vld [vmem:[%s0 + $0x159] sm:$0xff]
    %v106 = vld [vmem:[%s0 + $0x169] sm:$0xff]
    %v107 = vld [vmem:[%s0 + $0x171] sm:$0xff]
    %v108 = vld [vmem:[%s0 + $0x1b1] sm:$0xff]
    %v109 = vld [vmem:[%s0 + $0x1b9] sm:$0xff]
    %v110 = vld [vmem:[%s0 + $0x1c9] sm:$0xff]
    %v111 = vld [vmem:[%s0 + $0x1d1] sm:$0xff]
    %v112 = vld [vmem:[%s0 + $0x1e1] sm:$0xff]
    %v113 = vld [vmem:[%s0 + $0x1e9] sm:$0xff]
    %v114 = vld [vmem:[%s0 + $0x1f9] sm:$0xff]
    %v115 = vld [vmem:[%s0 + $0x201] sm:$0xff]
    %v116 = vld [vmem:[%s0 + $0x211] sm:$0xff]
    %v117 = vld [vmem:[%s0 + $0x219] sm:$0xff]
    %v118 = vld [vmem:[%s0 + $0x229] sm:$0xff]
    %v119 = vld [vmem:[%s0 + $0x231] sm:$0xff]
    %v120 = vld [vmem:[%s0 + $0x241] sm:$0xff]
    %v121 = vld [vmem:[%s0 + $0x249] sm:$0xff]
    %v122 = vld [vmem:[%s0 + $0x259] sm:$0xff]
    %v123 = vld [vmem:[%s0 + $0x261] sm:$0xff]
    %v124 = vld [vmem:[%s0 + $0x271] sm:$0xff]
    %v125 = vld [vmem:[%s0 + $0x279] sm:$0xff]
    %v126 = vld [vmem:[%s0 + $0x289] sm:$0xff]
    %v127 = vld [vmem:[%s0 + $0x291] sm:$0xff]
    %v128 = vld [vmem:[%s0 + $0x2a1] sm:$0xff]
    %v129 = vld [vmem:[%s0 + $0x2a9] sm:$0xff]
    %v130 = vld [vmem:[%s0 + $0x2b9] sm:$0xff]
    %v131 = vld [vmem:[%s0 + $0x2c1] sm:$0xff]
    %v132 = vld [vmem:[%s0 + $0x2d1] sm:$0xff]
    %v133 = vld [vmem:[%s0 + $0x2d9] sm:$0xff]
    %v134 = vld [vmem:[%s0 + $0x2e9] sm:$0xff]
    %v135 = vld [vmem:[%s0 + $0x2f1] sm:$0xff]
    %v136 = vld [vmem:[%s0 + $0x301] sm:$0xff]
    %v137 = vld [vmem:[%s0 + $0x309] sm:$0xff]
    %v138 = vld [vmem:[%s0 + $0x319] sm:$0xff]
    %v139 = vld [vmem:[%s0 + $0x321] sm:$0xff]
    %v140 = vld [vmem:[%s0 + $0x2] sm:$0xff]
    %v141 = vld [vmem:[%s0 + $0xa] sm:$0xff]
    %v142 = vld [vmem:[%s0 + $0x1a] sm:$0xff]
    %v143 = vld [vmem:[%s0 + $0x22] sm:$0xff]
    %v144 = vld [vmem:[%s0 + $0x32] sm:$0xff]
    %v145 = vld [vmem:[%s0 + $0x3a] sm:$0xff]
    %v146 = vld [vmem:[%s0 + $0x4a] sm:$0xff]
    %v147 = vld [vmem:[%s0 + $0x52] sm:$0xff]
    %v148 = vld [vmem:[%s0 + $0x62] sm:$0xff]
    %v149 = vld [vmem:[%s0 + $0x6a] sm:$0xff]
    %v150 = vld [vmem:[%s0 + $0x7a] sm:$0xff]
    %v151 = vld [vmem:[%s0 + $0x82] sm:$0xff]
    %v152 = vld [vmem:[%s0 + $0x92] sm:$0xff]
    %v153 = vld [vmem:[%s0 + $0x9a] sm:$0xff]
    %v154 = vld [vmem:[%s0 + $0xaa] sm:$0xff]
    %v155 = vld [vmem:[%s0 + $0xb2] sm:$0xff]
    %v156 = vld [vmem:[%s0 + $0xc2] sm:$0xff]
    %v157 = vld [vmem:[%s0 + $0xca] sm:$0xff]
    %v158 = vld [vmem:[%s0 + $0xda] sm:$0xff]
    %v159 = vld [vmem:[%s0 + $0xe2] sm:$0xff]
    %v160 = vld [vmem:[%s0 + $0xf2] sm:$0xff]
    %v161 = vld [vmem:[%s0 + $0xfa] sm:$0xff]
    %v162 = vld [vmem:[%s0 + $0x10a] sm:$0xff]
    %v163 = vld [vmem:[%s0 + $0x112] sm:$0xff]
    %v164 = vld [vmem:[%s0 + $0x122] sm:$0xff]
    %v165 = vld [vmem:[%s0 + $0x12a] sm:$0xff]
    %v166 = vld [vmem:[%s0 + $0x13a] sm:$0xff]
    %v167 = vld [vmem:[%s0 + $0x142] sm:$0xff]
    %v168 = vld [vmem:[%s0 + $0x152] sm:$0xff]
    %v169 = vld [vmem:[%s0 + $0x15a] sm:$0xff]
    %v170 = vld [vmem:[%s0 + $0x16a] sm:$0xff]
    %v171 = vld [vmem:[%s0 + $0x172] sm:$0xff]
    %v172 = vld [vmem:[%s0 + $0x1b2] sm:$0xff]
    %v173 = vld [vmem:[%s0 + $0x1ba] sm:$0xff]
    %v174 = vld [vmem:[%s0 + $0x1ca] sm:$0xff]
    %v175 = vld [vmem:[%s0 + $0x1d2] sm:$0xff]
    %v176 = vld [vmem:[%s0 + $0x1e2] sm:$0xff]
    %v177 = vld [vmem:[%s0 + $0x1ea] sm:$0xff]
    %v178 = vld [vmem:[%s0 + $0x1fa] sm:$0xff]
    %v179 = vld [vmem:[%s0 + $0x202] sm:$0xff]
    %v180 = vld [vmem:[%s0 + $0x212] sm:$0xff]
    %v181 = vld [vmem:[%s0 + $0x21a] sm:$0xff]
    %v182 = vld [vmem:[%s0 + $0x22a] sm:$0xff]
    %v183 = vld [vmem:[%s0 + $0x232] sm:$0xff]
    %v184 = vld [vmem:[%s0 + $0x242] sm:$0xff]
    %v185 = vld [vmem:[%s0 + $0x24a] sm:$0xff]
    %v186 = vld [vmem:[%s0 + $0x25a] sm:$0xff]
    %v187 = vld [vmem:[%s0 + $0x262] sm:$0xff]
    %v188 = vld [vmem:[%s0 + $0x272] sm:$0xff]
    %v189 = vld [vmem:[%s0 + $0x27a] sm:$0xff]
    %v190 = vld [vmem:[%s0 + $0x28a] sm:$0xff]
    %v191 = vld [vmem:[%s0 + $0x292] sm:$0xff]
    %v192 = vld [vmem:[%s0 + $0x2a2] sm:$0xff]
    %v193 = vld [vmem:[%s0 + $0x2aa] sm:$0xff]
    %v194 = vld [vmem:[%s0 + $0x2ba] sm:$0xff]
    %v195 = vld [vmem:[%s0 + $0x2c2] sm:$0xff]
    %v196 = vld [vmem:[%s0 + $0x2d2] sm:$0xff]
    %v197 = vld [vmem:[%s0 + $0x2da] sm:$0xff]
    %v198 = vld [vmem:[%s0 + $0x2ea] sm:$0xff]
    %v199 = vld [vmem:[%s0 + $0x2f2] sm:$0xff]
    %v200 = vld [vmem:[%s0 + $0x302] sm:$0xff]
    %v201 = vld [vmem:[%s0 + $0x30a] sm:$0xff]
    %v202 = vld [vmem:[%s0 + $0x31a] sm:$0xff]
    %v203 = vld [vmem:[%s0 + $0x322] sm:$0xff]
    %s204 = scalar_lea.vmem %s0, 24
    %v205 = vld [vmem:[%s204] sm:$0xff]
    %v206 = vld [vmem:[%s204 + $0x8] sm:$0xff]
    %v207 = vld [vmem:[%s204 + $0x18] sm:$0xff]
    %v208 = vld [vmem:[%s204 + $0x20] sm:$0xff]
    %v209 = vld [vmem:[%s204 + $0x30] sm:$0xff]
    %v210 = vld [vmem:[%s204 + $0x38] sm:$0xff]
    %v211 = vld [vmem:[%s204 + $0x48] sm:$0xff]
    %v212 = vld [vmem:[%s204 + $0x50] sm:$0xff]
    %v213 = vld [vmem:[%s204 + $0x60] sm:$0xff]
    %v214 = vld [vmem:[%s204 + $0x68] sm:$0xff]
    %v215 = vld [vmem:[%s204 + $0x78] sm:$0xff]
    %v216 = vld [vmem:[%s204 + $0x80] sm:$0xff]
    %v217 = vld [vmem:[%s204 + $0x90] sm:$0xff]
    %v218 = vld [vmem:[%s204 + $0x98] sm:$0xff]
    %v219 = vld [vmem:[%s204 + $0xa8] sm:$0xff]
    %v220 = vld [vmem:[%s204 + $0xb0] sm:$0xff]
    %v221 = vld [vmem:[%s204 + $0xc0] sm:$0xff]
    %v222 = vld [vmem:[%s204 + $0xc8] sm:$0xff]
    %v223 = vld [vmem:[%s204 + $0xd8] sm:$0xff]
    %v224 = vld [vmem:[%s204 + $0xe0] sm:$0xff]
    %v225 = vld [vmem:[%s204 + $0xf0] sm:$0xff]
    %v226 = vld [vmem:[%s204 + $0xf8] sm:$0xff]
    %v227 = vld [vmem:[%s204 + $0x108] sm:$0xff]
    %v228 = vld [vmem:[%s204 + $0x110] sm:$0xff]
    %v229 = vld [vmem:[%s204 + $0x120] sm:$0xff]
    %v230 = vld [vmem:[%s204 + $0x128] sm:$0xff]
    %v231 = vld [vmem:[%s204 + $0x138] sm:$0xff]
    %v232 = vld [vmem:[%s204 + $0x140] sm:$0xff]
    %v233 = vld [vmem:[%s204 + $0x150] sm:$0xff]
    %v234 = vld [vmem:[%s204 + $0x158] sm:$0xff]
    %v235 = vld [vmem:[%s204 + $0x168] sm:$0xff]
    %v236 = vld [vmem:[%s204 + $0x170] sm:$0xff]
    %v237 = vld [vmem:[%s204 + $0x1b0] sm:$0xff]
    %v238 = vld [vmem:[%s204 + $0x1b8] sm:$0xff]
    %v239 = vld [vmem:[%s204 + $0x1c8] sm:$0xff]
    %v240 = vld [vmem:[%s204 + $0x1d0] sm:$0xff]
    %v241 = vld [vmem:[%s204 + $0x1e0] sm:$0xff]
    %v242 = vld [vmem:[%s204 + $0x1e8] sm:$0xff]
    %v243 = vld [vmem:[%s204 + $0x1f8] sm:$0xff]
    %v244 = vld [vmem:[%s204 + $0x200] sm:$0xff]
    %v245 = vld [vmem:[%s204 + $0x210] sm:$0xff]
    %v246 = vld [vmem:[%s204 + $0x218] sm:$0xff]
    %v247 = vld [vmem:[%s204 + $0x228] sm:$0xff]
    %v248 = vld [vmem:[%s204 + $0x230] sm:$0xff]
    %v249 = vld [vmem:[%s204 + $0x240] sm:$0xff]
    %v250 = vld [vmem:[%s204 + $0x248] sm:$0xff]
    %v251 = vld [vmem:[%s204 + $0x258] sm:$0xff]
    %v252 = vld [vmem:[%s204 + $0x260] sm:$0xff]
    %v253 = vld [vmem:[%s204 + $0x270] sm:$0xff]
    %v254 = vld [vmem:[%s204 + $0x278] sm:$0xff]
    %v255 = vld [vmem:[%s204 + $0x288] sm:$0xff]
    %v256 = vld [vmem:[%s204 + $0x290] sm:$0xff]
    %v257 = vld [vmem:[%s204 + $0x2a0] sm:$0xff]
    %v258 = vld [vmem:[%s204 + $0x2a8] sm:$0xff]
    %v259 = vld [vmem:[%s204 + $0x2b8] sm:$0xff]
    %v260 = vld [vmem:[%s204 + $0x2c0] sm:$0xff]
    %v261 = vld [vmem:[%s204 + $0x2d0] sm:$0xff]
    %v262 = vld [vmem:[%s204 + $0x2d8] sm:$0xff]
    %v263 = vld [vmem:[%s204 + $0x2e8] sm:$0xff]
    %v264 = vld [vmem:[%s204 + $0x2f0] sm:$0xff]
    %v265 = vld [vmem:[%s204 + $0x300] sm:$0xff]
    %v266 = vld [vmem:[%s204 + $0x308] sm:$0xff]
    %v267 = vld [vmem:[%s204 + $0x318] sm:$0xff]
    %v268 = vld [vmem:[%s204 + $0x320] sm:$0xff]
    %v269 = vld [vmem:[%s204 + $0x1] sm:$0xff]
    %v270 = vld [vmem:[%s204 + $0x9] sm:$0xff]
    %v271 = vld [vmem:[%s204 + $0x19] sm:$0xff]
    %v272 = vld [vmem:[%s204 + $0x21] sm:$0xff]
    %v273 = vld [vmem:[%s204 + $0x31] sm:$0xff]
    %v274 = vld [vmem:[%s204 + $0x39] sm:$0xff]
    %v275 = vld [vmem:[%s204 + $0x49] sm:$0xff]
    %v276 = vld [vmem:[%s204 + $0x51] sm:$0xff]
    %v277 = vld [vmem:[%s204 + $0x61] sm:$0xff]
    %v278 = vld [vmem:[%s204 + $0x69] sm:$0xff]
    %v279 = vld [vmem:[%s204 + $0x79] sm:$0xff]
    %v280 = vld [vmem:[%s204 + $0x81] sm:$0xff]
    %v281 = vld [vmem:[%s204 + $0x91] sm:$0xff]
    %v282 = vld [vmem:[%s204 + $0x99] sm:$0xff]
    %v283 = vld [vmem:[%s204 + $0xa9] sm:$0xff]
    %v284 = vld [vmem:[%s204 + $0xb1] sm:$0xff]
    %v285 = vld [vmem:[%s204 + $0xc1] sm:$0xff]
    %v286 = vld [vmem:[%s204 + $0xc9] sm:$0xff]
    %v287 = vld [vmem:[%s204 + $0xd9] sm:$0xff]
    %v288 = vld [vmem:[%s204 + $0xe1] sm:$0xff]
    %v289 = vld [vmem:[%s204 + $0xf1] sm:$0xff]
    %v290 = vld [vmem:[%s204 + $0xf9] sm:$0xff]
    %v291 = vld [vmem:[%s204 + $0x109] sm:$0xff]
    %v292 = vld [vmem:[%s204 + $0x111] sm:$0xff]
    %v293 = vld [vmem:[%s204 + $0x121] sm:$0xff]
    %v294 = vld [vmem:[%s204 + $0x129] sm:$0xff]
    %v295 = vld [vmem:[%s204 + $0x139] sm:$0xff]
    %v296 = vld [vmem:[%s204 + $0x141] sm:$0xff]
    %v297 = vld [vmem:[%s204 + $0x151] sm:$0xff]
    %v298 = vld [vmem:[%s204 + $0x159] sm:$0xff]
    %v299 = vld [vmem:[%s204 + $0x169] sm:$0xff]
    %v300 = vld [vmem:[%s204 + $0x171] sm:$0xff]
    %v301 = vld [vmem:[%s204 + $0x1b1] sm:$0xff]
    %v302 = vld [vmem:[%s204 + $0x1b9] sm:$0xff]
    %v303 = vld [vmem:[%s204 + $0x1c9] sm:$0xff]
    %v304 = vld [vmem:[%s204 + $0x1d1] sm:$0xff]
    %v305 = vld [vmem:[%s204 + $0x1e1] sm:$0xff]
    %v306 = vld [vmem:[%s204 + $0x1e9] sm:$0xff]
    %v307 = vld [vmem:[%s204 + $0x1f9] sm:$0xff]
    %v308 = vld [vmem:[%s204 + $0x201] sm:$0xff]
    %v309 = vld [vmem:[%s204 + $0x211] sm:$0xff]
    %v310 = vld [vmem:[%s204 + $0x219] sm:$0xff]
    %v311 = vld [vmem:[%s204 + $0x229] sm:$0xff]
    %v312 = vld [vmem:[%s204 + $0x231] sm:$0xff]
    %v313 = vld [vmem:[%s204 + $0x241] sm:$0xff]
    %v314 = vld [vmem:[%s204 + $0x249] sm:$0xff]
    %v315 = vld [vmem:[%s204 + $0x259] sm:$0xff]
    %v316 = vld [vmem:[%s204 + $0x261] sm:$0xff]
    %v317 = vld [vmem:[%s204 + $0x271] sm:$0xff]
    %v318 = vld [vmem:[%s204 + $0x279] sm:$0xff]
    %v319 = vld [vmem:[%s204 + $0x289] sm:$0xff]
    %v320 = vld [vmem:[%s204 + $0x291] sm:$0xff]
    %v321 = vld [vmem:[%s204 + $0x2a1] sm:$0xff]
    %v322 = vld [vmem:[%s204 + $0x2a9] sm:$0xff]
    %v323 = vld [vmem:[%s204 + $0x2b9] sm:$0xff]
    %v324 = vld [vmem:[%s204 + $0x2c1] sm:$0xff]
    %v325 = vld [vmem:[%s204 + $0x2d1] sm:$0xff]
    %v326 = vld [vmem:[%s204 + $0x2d9] sm:$0xff]
    %v327 = vld [vmem:[%s204 + $0x2e9] sm:$0xff]
    %v328 = vld [vmem:[%s204 + $0x2f1] sm:$0xff]
    %v329 = vld [vmem:[%s204 + $0x301] sm:$0xff]
    %v330 = vld [vmem:[%s204 + $0x309] sm:$0xff]
    %v331 = vld [vmem:[%s204 + $0x319] sm:$0xff]
    %v332 = vld [vmem:[%s204 + $0x321] sm:$0xff]
    %v333 = vld [vmem:[%s204 + $0x2] sm:$0xff]
    %v334 = vld [vmem:[%s204 + $0xa] sm:$0xff]
    %v335 = vld [vmem:[%s204 + $0x1a] sm:$0xff]
    %v336 = vld [vmem:[%s204 + $0x22] sm:$0xff]
    %v337 = vld [vmem:[%s204 + $0x32] sm:$0xff]
    %v338 = vld [vmem:[%s204 + $0x3a] sm:$0xff]
    %v339 = vld [vmem:[%s204 + $0x4a] sm:$0xff]
    %v340 = vld [vmem:[%s204 + $0x52] sm:$0xff]
    %v341 = vld [vmem:[%s204 + $0x62] sm:$0xff]
    %v342 = vld [vmem:[%s204 + $0x6a] sm:$0xff]
    %v343 = vld [vmem:[%s204 + $0x7a] sm:$0xff]
    %v344 = vld [vmem:[%s204 + $0x82] sm:$0xff]
    %v345 = vld [vmem:[%s204 + $0x92] sm:$0xff]
    %v346 = vld [vmem:[%s204 + $0x9a] sm:$0xff]
    %v347 = vld [vmem:[%s204 + $0xaa] sm:$0xff]
    %v348 = vld [vmem:[%s204 + $0xb2] sm:$0xff]
    %v349 = vld [vmem:[%s204 + $0xc2] sm:$0xff]
    %v350 = vld [vmem:[%s204 + $0xca] sm:$0xff]
    %v351 = vld [vmem:[%s204 + $0xda] sm:$0xff]
    %v352 = vld [vmem:[%s204 + $0xe2] sm:$0xff]
    %v353 = vld [vmem:[%s204 + $0xf2] sm:$0xff]
    %v354 = vld [vmem:[%s204 + $0xfa] sm:$0xff]
    %v355 = vld [vmem:[%s204 + $0x10a] sm:$0xff]
    %v356 = vld [vmem:[%s204 + $0x112] sm:$0xff]
    %v357 = vld [vmem:[%s204 + $0x122] sm:$0xff]
    %v358 = vld [vmem:[%s204 + $0x12a] sm:$0xff]
    %v359 = vld [vmem:[%s204 + $0x13a] sm:$0xff]
    %v360 = vld [vmem:[%s204 + $0x142] sm:$0xff]
    %v361 = vld [vmem:[%s204 + $0x152] sm:$0xff]
    %v362 = vld [vmem:[%s204 + $0x15a] sm:$0xff]
    %v363 = vld [vmem:[%s204 + $0x16a] sm:$0xff]
    %v364 = vld [vmem:[%s204 + $0x172] sm:$0xff]
    %v365 = vld [vmem:[%s204 + $0x1b2] sm:$0xff]
    %v366 = vld [vmem:[%s204 + $0x1ba] sm:$0xff]
    %v367 = vld [vmem:[%s204 + $0x1ca] sm:$0xff]
    %v368 = vld [vmem:[%s204 + $0x1d2] sm:$0xff]
    %v369 = vld [vmem:[%s204 + $0x1e2] sm:$0xff]
    %v370 = vld [vmem:[%s204 + $0x1ea] sm:$0xff]
    %v371 = vld [vmem:[%s204 + $0x1fa] sm:$0xff]
    %v372 = vld [vmem:[%s204 + $0x202] sm:$0xff]
    %v373 = vld [vmem:[%s204 + $0x212] sm:$0xff]
    %v374 = vld [vmem:[%s204 + $0x21a] sm:$0xff]
    %v375 = vld [vmem:[%s204 + $0x22a] sm:$0xff]
    %v376 = vld [vmem:[%s204 + $0x232] sm:$0xff]
    %v377 = vld [vmem:[%s204 + $0x242] sm:$0xff]
    %v378 = vld [vmem:[%s204 + $0x24a] sm:$0xff]
    %v379 = vld [vmem:[%s204 + $0x25a] sm:$0xff]
    %v380 = vld [vmem:[%s204 + $0x262] sm:$0xff]
    %v381 = vld [vmem:[%s204 + $0x272] sm:$0xff]
    %v382 = vld [vmem:[%s204 + $0x27a] sm:$0xff]
    %v383 = vld [vmem:[%s204 + $0x28a] sm:$0xff]
    %v384 = vld [vmem:[%s204 + $0x292] sm:$0xff]
    %v385 = vld [vmem:[%s204 + $0x2a2] sm:$0xff]
    %v386 = vld [vmem:[%s204 + $0x2aa] sm:$0xff]
    %v387 = vld [vmem:[%s204 + $0x2ba] sm:$0xff]
    %v388 = vld [vmem:[%s204 + $0x2c2] sm:$0xff]
    %v389 = vld [vmem:[%s204 + $0x2d2] sm:$0xff]
    %v390 = vld [vmem:[%s204 + $0x2da] sm:$0xff]
    %v391 = vld [vmem:[%s204 + $0x2ea] sm:$0xff]
    %v392 = vld [vmem:[%s204 + $0x2f2] sm:$0xff]
    %v393 = vld [vmem:[%s204 + $0x302] sm:$0xff]
    %v394 = vld [vmem:[%s204 + $0x30a] sm:$0xff]
    %v395 = vld [vmem:[%s204 + $0x31a] sm:$0xff]
    %v396 = vld [vmem:[%s204 + $0x322] sm:$0xff]
    %s397 = scalar_lea.vmem %s0, 48
    %v398 = vld [vmem:[%s397] sm:$0xff]
    %v399 = vld [vmem:[%s397 + $0x8] sm:$0xff]
    %v400 = vld [vmem:[%s397 + $0x18] sm:$0xff]
    %v401 = vld [vmem:[%s397 + $0x20] sm:$0xff]
    %v402 = vld [vmem:[%s397 + $0x30] sm:$0xff]
    %v403 = vld [vmem:[%s397 + $0x38] sm:$0xff]
    %v404 = vld [vmem:[%s397 + $0x48] sm:$0xff]
    %v405 = vld [vmem:[%s397 + $0x50] sm:$0xff]
    %v406 = vld [vmem:[%s397 + $0x60] sm:$0xff]
    %v407 = vld [vmem:[%s397 + $0x68] sm:$0xff]
    %v408 = vld [vmem:[%s397 + $0x78] sm:$0xff]
    %v409 = vld [vmem:[%s397 + $0x80] sm:$0xff]
    %v410 = vld [vmem:[%s397 + $0x90] sm:$0xff]
    %v411 = vld [vmem:[%s397 + $0x98] sm:$0xff]
    %v412 = vld [vmem:[%s397 + $0xa8] sm:$0xff]
    %v413 = vld [vmem:[%s397 + $0xb0] sm:$0xff]
    %v414 = vld [vmem:[%s397 + $0xc0] sm:$0xff]
    %v415 = vld [vmem:[%s397 + $0xc8] sm:$0xff]
    %v416 = vld [vmem:[%s397 + $0xd8] sm:$0xff]
    %v417 = vld [vmem:[%s397 + $0xe0] sm:$0xff]
    %v418 = vld [vmem:[%s397 + $0xf0] sm:$0xff]
    %v419 = vld [vmem:[%s397 + $0xf8] sm:$0xff]
    %v420 = vld [vmem:[%s397 + $0x108] sm:$0xff]
    %v421 = vld [vmem:[%s397 + $0x110] sm:$0xff]
    %v422 = vld [vmem:[%s397 + $0x120] sm:$0xff]
    %v423 = vld [vmem:[%s397 + $0x128] sm:$0xff]
    %v424 = vld [vmem:[%s397 + $0x138] sm:$0xff]
    %v425 = vld [vmem:[%s397 + $0x140] sm:$0xff]
    %v426 = vld [vmem:[%s397 + $0x150] sm:$0xff]
    %v427 = vld [vmem:[%s397 + $0x158] sm:$0xff]
    %v428 = vld [vmem:[%s397 + $0x168] sm:$0xff]
    %v429 = vld [vmem:[%s397 + $0x170] sm:$0xff]
    %v430 = vld [vmem:[%s397 + $0x1b0] sm:$0xff]
    %v431 = vld [vmem:[%s397 + $0x1b8] sm:$0xff]
    %v432 = vld [vmem:[%s397 + $0x1c8] sm:$0xff]
    %v433 = vld [vmem:[%s397 + $0x1d0] sm:$0xff]
    %v434 = vld [vmem:[%s397 + $0x1e0] sm:$0xff]
    %v435 = vld [vmem:[%s397 + $0x1e8] sm:$0xff]
    %v436 = vld [vmem:[%s397 + $0x1f8] sm:$0xff]
    %v437 = vld [vmem:[%s397 + $0x200] sm:$0xff]
    %v438 = vld [vmem:[%s397 + $0x210] sm:$0xff]
    %v439 = vld [vmem:[%s397 + $0x218] sm:$0xff]
    %v440 = vld [vmem:[%s397 + $0x228] sm:$0xff]
    %v441 = vld [vmem:[%s397 + $0x230] sm:$0xff]
    %v442 = vld [vmem:[%s397 + $0x240] sm:$0xff]
    %v443 = vld [vmem:[%s397 + $0x248] sm:$0xff]
    %v444 = vld [vmem:[%s397 + $0x258] sm:$0xff]
    %v445 = vld [vmem:[%s397 + $0x260] sm:$0xff]
    %v446 = vld [vmem:[%s397 + $0x270] sm:$0xff]
    %v447 = vld [vmem:[%s397 + $0x278] sm:$0xff]
    %v448 = vld [vmem:[%s397 + $0x288] sm:$0xff]
    %v449 = vld [vmem:[%s397 + $0x290] sm:$0xff]
    %v450 = vld [vmem:[%s397 + $0x2a0] sm:$0xff]
    %v451 = vld [vmem:[%s397 + $0x2a8] sm:$0xff]
    %v452 = vld [vmem:[%s397 + $0x2b8] sm:$0xff]
    %v453 = vld [vmem:[%s397 + $0x2c0] sm:$0xff]
    %v454 = vld [vmem:[%s397 + $0x2d0] sm:$0xff]
    %v455 = vld [vmem:[%s397 + $0x2d8] sm:$0xff]
    %v456 = vld [vmem:[%s397 + $0x2e8] sm:$0xff]
    %v457 = vld [vmem:[%s397 + $0x2f0] sm:$0xff]
    %v458 = vld [vmem:[%s397 + $0x300] sm:$0xff]
    %v459 = vld [vmem:[%s397 + $0x308] sm:$0xff]
    %v460 = vld [vmem:[%s397 + $0x318] sm:$0xff]
    %v461 = vld [vmem:[%s397 + $0x320] sm:$0xff]
    %v462 = vld [vmem:[%s397 + $0x1] sm:$0xff]
    %v463 = vld [vmem:[%s397 + $0x9] sm:$0xff]
    %v464 = vld [vmem:[%s397 + $0x19] sm:$0xff]
    %v465 = vld [vmem:[%s397 + $0x21] sm:$0xff]
    %v466 = vld [vmem:[%s397 + $0x31] sm:$0xff]
    %v467 = vld [vmem:[%s397 + $0x39] sm:$0xff]
    %v468 = vld [vmem:[%s397 + $0x49] sm:$0xff]
    %v469 = vld [vmem:[%s397 + $0x51] sm:$0xff]
    %v470 = vld [vmem:[%s397 + $0x61] sm:$0xff]
    %v471 = vld [vmem:[%s397 + $0x69] sm:$0xff]
    %v472 = vld [vmem:[%s397 + $0x79] sm:$0xff]
    %v473 = vld [vmem:[%s397 + $0x81] sm:$0xff]
    %v474 = vld [vmem:[%s397 + $0x91] sm:$0xff]
    %v475 = vld [vmem:[%s397 + $0x99] sm:$0xff]
    %v476 = vld [vmem:[%s397 + $0xa9] sm:$0xff]
    %v477 = vld [vmem:[%s397 + $0xb1] sm:$0xff]
    %v478 = vld [vmem:[%s397 + $0xc1] sm:$0xff]
    %v479 = vld [vmem:[%s397 + $0xc9] sm:$0xff]
    %v480 = vld [vmem:[%s397 + $0xd9] sm:$0xff]
    %v481 = vld [vmem:[%s397 + $0xe1] sm:$0xff]
    %v482 = vld [vmem:[%s397 + $0xf1] sm:$0xff]
    %v483 = vld [vmem:[%s397 + $0xf9] sm:$0xff]
    %v484 = vld [vmem:[%s397 + $0x109] sm:$0xff]
    %v485 = vld [vmem:[%s397 + $0x111] sm:$0xff]
    %v486 = vld [vmem:[%s397 + $0x121] sm:$0xff]
    %v487 = vld [vmem:[%s397 + $0x129] sm:$0xff]
    %v488 = vld [vmem:[%s397 + $0x139] sm:$0xff]
    %v489 = vld [vmem:[%s397 + $0x141] sm:$0xff]
    %v490 = vld [vmem:[%s397 + $0x151] sm:$0xff]
    %v491 = vld [vmem:[%s397 + $0x159] sm:$0xff]
    %v492 = vld [vmem:[%s397 + $0x169] sm:$0xff]
    %v493 = vld [vmem:[%s397 + $0x171] sm:$0xff]
    %v494 = vld [vmem:[%s397 + $0x1b1] sm:$0xff]
    %v495 = vld [vmem:[%s397 + $0x1b9] sm:$0xff]
    %v496 = vld [vmem:[%s397 + $0x1c9] sm:$0xff]
    %v497 = vld [vmem:[%s397 + $0x1d1] sm:$0xff]
    %v498 = vld [vmem:[%s397 + $0x1e1] sm:$0xff]
    %v499 = vld [vmem:[%s397 + $0x1e9] sm:$0xff]
    %v500 = vld [vmem:[%s397 + $0x1f9] sm:$0xff]
    %v501 = vld [vmem:[%s397 + $0x201] sm:$0xff]
    %v502 = vld [vmem:[%s397 + $0x211] sm:$0xff]
    %v503 = vld [vmem:[%s397 + $0x219] sm:$0xff]
    %v504 = vld [vmem:[%s397 + $0x229] sm:$0xff]
    %v505 = vld [vmem:[%s397 + $0x231] sm:$0xff]
    %v506 = vld [vmem:[%s397 + $0x241] sm:$0xff]
    %v507 = vld [vmem:[%s397 + $0x249] sm:$0xff]
    %v508 = vld [vmem:[%s397 + $0x259] sm:$0xff]
    %v509 = vld [vmem:[%s397 + $0x261] sm:$0xff]
    %v510 = vld [vmem:[%s397 + $0x271] sm:$0xff]
    %v511 = vld [vmem:[%s397 + $0x279] sm:$0xff]
    %v512 = vld [vmem:[%s397 + $0x289] sm:$0xff]
    %v513 = vld [vmem:[%s397 + $0x291] sm:$0xff]
    %v514 = vld [vmem:[%s397 + $0x2a1] sm:$0xff]
    %v515 = vld [vmem:[%s397 + $0x2a9] sm:$0xff]
    %v516 = vld [vmem:[%s397 + $0x2b9] sm:$0xff]
    %v517 = vld [vmem:[%s397 + $0x2c1] sm:$0xff]
    %v518 = vld [vmem:[%s397 + $0x2d1] sm:$0xff]
    %v519 = vld [vmem:[%s397 + $0x2d9] sm:$0xff]
    %v520 = vld [vmem:[%s397 + $0x2e9] sm:$0xff]
    %v521 = vld [vmem:[%s397 + $0x2f1] sm:$0xff]
    %v522 = vld [vmem:[%s397 + $0x301] sm:$0xff]
    %v523 = vld [vmem:[%s397 + $0x309] sm:$0xff]
    %v524 = vld [vmem:[%s397 + $0x319] sm:$0xff]
    %v525 = vld [vmem:[%s397 + $0x321] sm:$0xff]
    %v526 = vld [vmem:[%s397 + $0x2] sm:$0xff]
    %v527 = vld [vmem:[%s397 + $0xa] sm:$0xff]
    %v528 = vld [vmem:[%s397 + $0x1a] sm:$0xff]
    %v529 = vld [vmem:[%s397 + $0x22] sm:$0xff]
    %v530 = vld [vmem:[%s397 + $0x32] sm:$0xff]
    %v531 = vld [vmem:[%s397 + $0x3a] sm:$0xff]
    %v532 = vld [vmem:[%s397 + $0x4a] sm:$0xff]
    %v533 = vld [vmem:[%s397 + $0x52] sm:$0xff]
    %v534 = vld [vmem:[%s397 + $0x62] sm:$0xff]
    %v535 = vld [vmem:[%s397 + $0x6a] sm:$0xff]
    %v536 = vld [vmem:[%s397 + $0x7a] sm:$0xff]
    %v537 = vld [vmem:[%s397 + $0x82] sm:$0xff]
    %v538 = vld [vmem:[%s397 + $0x92] sm:$0xff]
    %v539 = vld [vmem:[%s397 + $0x9a] sm:$0xff]
    %v540 = vld [vmem:[%s397 + $0xaa] sm:$0xff]
    %v541 = vld [vmem:[%s397 + $0xb2] sm:$0xff]
    %v542 = vld [vmem:[%s397 + $0xc2] sm:$0xff]
    %v543 = vld [vmem:[%s397 + $0xca] sm:$0xff]
    %v544 = vld [vmem:[%s397 + $0xda] sm:$0xff]
    %v545 = vld [vmem:[%s397 + $0xe2] sm:$0xff]
    %v546 = vld [vmem:[%s397 + $0xf2] sm:$0xff]
    %v547 = vld [vmem:[%s397 + $0xfa] sm:$0xff]
    %v548 = vld [vmem:[%s397 + $0x10a] sm:$0xff]
    %v549 = vld [vmem:[%s397 + $0x112] sm:$0xff]
    %v550 = vld [vmem:[%s397 + $0x122] sm:$0xff]
    %v551 = vld [vmem:[%s397 + $0x12a] sm:$0xff]
    %v552 = vld [vmem:[%s397 + $0x13a] sm:$0xff]
    %v553 = vld [vmem:[%s397 + $0x142] sm:$0xff]
    %v554 = vld [vmem:[%s397 + $0x152] sm:$0xff]
    %v555 = vld [vmem:[%s397 + $0x15a] sm:$0xff]
    %v556 = vld [vmem:[%s397 + $0x16a] sm:$0xff]
    %v557 = vld [vmem:[%s397 + $0x172] sm:$0xff]
    %v558 = vld [vmem:[%s397 + $0x1b2] sm:$0xff]
    %v559 = vld [vmem:[%s397 + $0x1ba] sm:$0xff]
    %v560 = vld [vmem:[%s397 + $0x1ca] sm:$0xff]
    %v561 = vld [vmem:[%s397 + $0x1d2] sm:$0xff]
    %v562 = vld [vmem:[%s397 + $0x1e2] sm:$0xff]
    %v563 = vld [vmem:[%s397 + $0x1ea] sm:$0xff]
    %v564 = vld [vmem:[%s397 + $0x1fa] sm:$0xff]
    %v565 = vld [vmem:[%s397 + $0x202] sm:$0xff]
    %v566 = vld [vmem:[%s397 + $0x212] sm:$0xff]
    %v567 = vld [vmem:[%s397 + $0x21a] sm:$0xff]
    %v568 = vld [vmem:[%s397 + $0x22a] sm:$0xff]
    %v569 = vld [vmem:[%s397 + $0x232] sm:$0xff]
    %v570 = vld [vmem:[%s397 + $0x242] sm:$0xff]
    %v571 = vld [vmem:[%s397 + $0x24a] sm:$0xff]
    %v572 = vld [vmem:[%s397 + $0x25a] sm:$0xff]
    %v573 = vld [vmem:[%s397 + $0x262] sm:$0xff]
    %v574 = vld [vmem:[%s397 + $0x272] sm:$0xff]
    %v575 = vld [vmem:[%s397 + $0x27a] sm:$0xff]
    %v576 = vld [vmem:[%s397 + $0x28a] sm:$0xff]
    %v577 = vld [vmem:[%s397 + $0x292] sm:$0xff]
    %v578 = vld [vmem:[%s397 + $0x2a2] sm:$0xff]
    %v579 = vld [vmem:[%s397 + $0x2aa] sm:$0xff]
    %v580 = vld [vmem:[%s397 + $0x2ba] sm:$0xff]
    %v581 = vld [vmem:[%s397 + $0x2c2] sm:$0xff]
    %v582 = vld [vmem:[%s397 + $0x2d2] sm:$0xff]
    %v583 = vld [vmem:[%s397 + $0x2da] sm:$0xff]
    %v584 = vld [vmem:[%s397 + $0x2ea] sm:$0xff]
    %v585 = vld [vmem:[%s397 + $0x2f2] sm:$0xff]
    %v586 = vld [vmem:[%s397 + $0x302] sm:$0xff]
    %v587 = vld [vmem:[%s397 + $0x30a] sm:$0xff]
    %v588 = vld [vmem:[%s397 + $0x31a] sm:$0xff]
    %v589 = vld [vmem:[%s397 + $0x322] sm:$0xff]
    %654 = vrot.lane.b32.xlu0 %v76, 4
    %v655 = vpop.permute.xlu0 %654
    %656 = vrot.lane.b32.xlu0 %v77, 4
    %v657 = vpop.permute.xlu0 %656
    %658 = vrot.lane.b32.xlu0 %v78, 4
    %v659 = vpop.permute.xlu0 %658
    %660 = vrot.lane.b32.xlu0 %v79, 4
    %v661 = vpop.permute.xlu0 %660
    %662 = vrot.lane.b32.xlu0 %v80, 4
    %v663 = vpop.permute.xlu0 %662
    %664 = vrot.lane.b32.xlu0 %v81, 4
    %v665 = vpop.permute.xlu0 %664
    %666 = vrot.lane.b32.xlu0 %v82, 4
    %v667 = vpop.permute.xlu0 %666
    %668 = vrot.lane.b32.xlu0 %v83, 4
    %v669 = vpop.permute.xlu0 %668
    %670 = vrot.lane.b32.xlu0 %v84, 4
    %v671 = vpop.permute.xlu0 %670
    %672 = vrot.lane.b32.xlu0 %v85, 4
    %v673 = vpop.permute.xlu0 %672
    %674 = vrot.lane.b32.xlu0 %v86, 4
    %v675 = vpop.permute.xlu0 %674
    %676 = vrot.lane.b32.xlu0 %v87, 4
    %v677 = vpop.permute.xlu0 %676
    %678 = vrot.lane.b32.xlu0 %v88, 4
    %v679 = vpop.permute.xlu0 %678
    %680 = vrot.lane.b32.xlu0 %v89, 4
    %v681 = vpop.permute.xlu0 %680
    %682 = vrot.lane.b32.xlu0 %v90, 4
    %v683 = vpop.permute.xlu0 %682
    %684 = vrot.lane.b32.xlu0 %v91, 4
    %v685 = vpop.permute.xlu0 %684
    %686 = vrot.lane.b32.xlu0 %v92, 4
    %v687 = vpop.permute.xlu0 %686
    %688 = vrot.lane.b32.xlu0 %v93, 4
    %v689 = vpop.permute.xlu0 %688
    %690 = vrot.lane.b32.xlu0 %v94, 4
    %v691 = vpop.permute.xlu0 %690
    %692 = vrot.lane.b32.xlu0 %v95, 4
    %v693 = vpop.permute.xlu0 %692
    %694 = vrot.lane.b32.xlu0 %v96, 4
    %v695 = vpop.permute.xlu0 %694
    %696 = vrot.lane.b32.xlu0 %v97, 4
    %v697 = vpop.permute.xlu0 %696
    %698 = vrot.lane.b32.xlu0 %v98, 4
    %v699 = vpop.permute.xlu0 %698
    %700 = vrot.lane.b32.xlu0 %v99, 4
    %v701 = vpop.permute.xlu0 %700
    %702 = vrot.lane.b32.xlu0 %v100, 4
    %v703 = vpop.permute.xlu0 %702
    %704 = vrot.lane.b32.xlu0 %v101, 4
    %v705 = vpop.permute.xlu0 %704
    %706 = vrot.lane.b32.xlu0 %v102, 4
    %v707 = vpop.permute.xlu0 %706
    %708 = vrot.lane.b32.xlu0 %v103, 4
    %v709 = vpop.permute.xlu0 %708
    %710 = vrot.lane.b32.xlu0 %v104, 4
    %v711 = vpop.permute.xlu0 %710
    %712 = vrot.lane.b32.xlu0 %v105, 4
    %v713 = vpop.permute.xlu0 %712
    %714 = vrot.lane.b32.xlu0 %v106, 4
    %v715 = vpop.permute.xlu0 %714
    %716 = vrot.lane.b32.xlu0 %v107, 4
    %v717 = vpop.permute.xlu0 %716
    %718 = vrot.lane.b32.xlu0 %v108, 4
    %v719 = vpop.permute.xlu0 %718
    %720 = vrot.lane.b32.xlu0 %v109, 4
    %v721 = vpop.permute.xlu0 %720
    %722 = vrot.lane.b32.xlu0 %v110, 4
    %v723 = vpop.permute.xlu0 %722
    %724 = vrot.lane.b32.xlu0 %v111, 4
    %v725 = vpop.permute.xlu0 %724
    %726 = vrot.lane.b32.xlu0 %v112, 4
    %v727 = vpop.permute.xlu0 %726
    %728 = vrot.lane.b32.xlu0 %v113, 4
    %v729 = vpop.permute.xlu0 %728
    %730 = vrot.lane.b32.xlu0 %v114, 4
    %v731 = vpop.permute.xlu0 %730
    %732 = vrot.lane.b32.xlu0 %v115, 4
    %v733 = vpop.permute.xlu0 %732
    %734 = vrot.lane.b32.xlu0 %v116, 4
    %v735 = vpop.permute.xlu0 %734
    %736 = vrot.lane.b32.xlu0 %v117, 4
    %v737 = vpop.permute.xlu0 %736
    %738 = vrot.lane.b32.xlu0 %v118, 4
    %v739 = vpop.permute.xlu0 %738
    %740 = vrot.lane.b32.xlu0 %v119, 4
    %v741 = vpop.permute.xlu0 %740
    %742 = vrot.lane.b32.xlu0 %v120, 4
    %v743 = vpop.permute.xlu0 %742
    %744 = vrot.lane.b32.xlu0 %v121, 4
    %v745 = vpop.permute.xlu0 %744
    %746 = vrot.lane.b32.xlu0 %v122, 4
    %v747 = vpop.permute.xlu0 %746
    %748 = vrot.lane.b32.xlu0 %v123, 4
    %v749 = vpop.permute.xlu0 %748
    %750 = vrot.lane.b32.xlu0 %v124, 4
    %v751 = vpop.permute.xlu0 %750
    %752 = vrot.lane.b32.xlu0 %v125, 4
    %v753 = vpop.permute.xlu0 %752
    %754 = vrot.lane.b32.xlu0 %v126, 4
    %v755 = vpop.permute.xlu0 %754
    %756 = vrot.lane.b32.xlu0 %v127, 4
    %v757 = vpop.permute.xlu0 %756
    %758 = vrot.lane.b32.xlu0 %v128, 4
    %v759 = vpop.permute.xlu0 %758
    %760 = vrot.lane.b32.xlu0 %v129, 4
    %v761 = vpop.permute.xlu0 %760
    %762 = vrot.lane.b32.xlu0 %v130, 4
    %v763 = vpop.permute.xlu0 %762
    %764 = vrot.lane.b32.xlu0 %v131, 4
    %v765 = vpop.permute.xlu0 %764
    %766 = vrot.lane.b32.xlu0 %v132, 4
    %v767 = vpop.permute.xlu0 %766
    %768 = vrot.lane.b32.xlu0 %v133, 4
    %v769 = vpop.permute.xlu0 %768
    %770 = vrot.lane.b32.xlu0 %v134, 4
    %v771 = vpop.permute.xlu0 %770
    %772 = vrot.lane.b32.xlu0 %v135, 4
    %v773 = vpop.permute.xlu0 %772
    %774 = vrot.lane.b32.xlu0 %v136, 4
    %v775 = vpop.permute.xlu0 %774
    %776 = vrot.lane.b32.xlu0 %v137, 4
    %v777 = vpop.permute.xlu0 %776
    %778 = vrot.lane.b32.xlu0 %v138, 4
    %v779 = vpop.permute.xlu0 %778
    %780 = vrot.lane.b32.xlu0 %v139, 4
    %v781 = vpop.permute.xlu0 %780
    %910 = vrot.lane.b32.xlu0 %v140, 8
    %v911 = vpop.permute.xlu0 %910
    %912 = vrot.lane.b32.xlu0 %v141, 8
    %v913 = vpop.permute.xlu0 %912
    %914 = vrot.lane.b32.xlu0 %v142, 8
    %v915 = vpop.permute.xlu0 %914
    %916 = vrot.lane.b32.xlu0 %v143, 8
    %v917 = vpop.permute.xlu0 %916
    %918 = vrot.lane.b32.xlu0 %v144, 8
    %v919 = vpop.permute.xlu0 %918
    %920 = vrot.lane.b32.xlu0 %v145, 8
    %v921 = vpop.permute.xlu0 %920
    %922 = vrot.lane.b32.xlu0 %v146, 8
    %v923 = vpop.permute.xlu0 %922
    %924 = vrot.lane.b32.xlu0 %v147, 8
    %v925 = vpop.permute.xlu0 %924
    %926 = vrot.lane.b32.xlu0 %v148, 8
    %v927 = vpop.permute.xlu0 %926
    %928 = vrot.lane.b32.xlu0 %v149, 8
    %v929 = vpop.permute.xlu0 %928
    %930 = vrot.lane.b32.xlu0 %v150, 8
    %v931 = vpop.permute.xlu0 %930
    %932 = vrot.lane.b32.xlu0 %v151, 8
    %v933 = vpop.permute.xlu0 %932
    %934 = vrot.lane.b32.xlu0 %v152, 8
    %v935 = vpop.permute.xlu0 %934
    %936 = vrot.lane.b32.xlu0 %v153, 8
    %v937 = vpop.permute.xlu0 %936
    %938 = vrot.lane.b32.xlu0 %v154, 8
    %v939 = vpop.permute.xlu0 %938
    %940 = vrot.lane.b32.xlu0 %v155, 8
    %v941 = vpop.permute.xlu0 %940
    %942 = vrot.lane.b32.xlu0 %v156, 8
    %v943 = vpop.permute.xlu0 %942
    %944 = vrot.lane.b32.xlu0 %v157, 8
    %v945 = vpop.permute.xlu0 %944
    %946 = vrot.lane.b32.xlu0 %v158, 8
    %v947 = vpop.permute.xlu0 %946
    %948 = vrot.lane.b32.xlu0 %v159, 8
    %v949 = vpop.permute.xlu0 %948
    %950 = vrot.lane.b32.xlu0 %v160, 8
    %v951 = vpop.permute.xlu0 %950
    %952 = vrot.lane.b32.xlu0 %v161, 8
    %v953 = vpop.permute.xlu0 %952
    %954 = vrot.lane.b32.xlu0 %v162, 8
    %v955 = vpop.permute.xlu0 %954
    %956 = vrot.lane.b32.xlu0 %v163, 8
    %v957 = vpop.permute.xlu0 %956
    %958 = vrot.lane.b32.xlu0 %v164, 8
    %v959 = vpop.permute.xlu0 %958
    %960 = vrot.lane.b32.xlu0 %v165, 8
    %v961 = vpop.permute.xlu0 %960
    %962 = vrot.lane.b32.xlu0 %v166, 8
    %v963 = vpop.permute.xlu0 %962
    %964 = vrot.lane.b32.xlu0 %v167, 8
    %v965 = vpop.permute.xlu0 %964
    %966 = vrot.lane.b32.xlu0 %v168, 8
    %v967 = vpop.permute.xlu0 %966
    %968 = vrot.lane.b32.xlu0 %v169, 8
    %v969 = vpop.permute.xlu0 %968
    %970 = vrot.lane.b32.xlu0 %v170, 8
    %v971 = vpop.permute.xlu0 %970
    %972 = vrot.lane.b32.xlu0 %v171, 8
    %v973 = vpop.permute.xlu0 %972
    %974 = vrot.lane.b32.xlu0 %v172, 8
    %v975 = vpop.permute.xlu0 %974
    %976 = vrot.lane.b32.xlu0 %v173, 8
    %v977 = vpop.permute.xlu0 %976
    %978 = vrot.lane.b32.xlu0 %v174, 8
    %v979 = vpop.permute.xlu0 %978
    %980 = vrot.lane.b32.xlu0 %v175, 8
    %v981 = vpop.permute.xlu0 %980
    %982 = vrot.lane.b32.xlu0 %v176, 8
    %v983 = vpop.permute.xlu0 %982
    %984 = vrot.lane.b32.xlu0 %v177, 8
    %v985 = vpop.permute.xlu0 %984
    %986 = vrot.lane.b32.xlu0 %v178, 8
    %v987 = vpop.permute.xlu0 %986
    %988 = vrot.lane.b32.xlu0 %v179, 8
    %v989 = vpop.permute.xlu0 %988
    %990 = vrot.lane.b32.xlu0 %v180, 8
    %v991 = vpop.permute.xlu0 %990
    %992 = vrot.lane.b32.xlu0 %v181, 8
    %v993 = vpop.permute.xlu0 %992
    %994 = vrot.lane.b32.xlu0 %v182, 8
    %v995 = vpop.permute.xlu0 %994
    %996 = vrot.lane.b32.xlu0 %v183, 8
    %v997 = vpop.permute.xlu0 %996
    %998 = vrot.lane.b32.xlu0 %v184, 8
    %v999 = vpop.permute.xlu0 %998
    %1000 = vrot.lane.b32.xlu0 %v185, 8
    %v1001 = vpop.permute.xlu0 %1000
    %1002 = vrot.lane.b32.xlu0 %v186, 8
    %v1003 = vpop.permute.xlu0 %1002
    %1004 = vrot.lane.b32.xlu0 %v187, 8
    %v1005 = vpop.permute.xlu0 %1004
    %1006 = vrot.lane.b32.xlu0 %v188, 8
    %v1007 = vpop.permute.xlu0 %1006
    %1008 = vrot.lane.b32.xlu0 %v189, 8
    %v1009 = vpop.permute.xlu0 %1008
    %1010 = vrot.lane.b32.xlu0 %v190, 8
    %v1011 = vpop.permute.xlu0 %1010
    %1012 = vrot.lane.b32.xlu0 %v191, 8
    %v1013 = vpop.permute.xlu0 %1012
    %1014 = vrot.lane.b32.xlu0 %v192, 8
    %v1015 = vpop.permute.xlu0 %1014
    %1016 = vrot.lane.b32.xlu0 %v193, 8
    %v1017 = vpop.permute.xlu0 %1016
    %1018 = vrot.lane.b32.xlu0 %v194, 8
    %v1019 = vpop.permute.xlu0 %1018
    %1020 = vrot.lane.b32.xlu0 %v195, 8
    %v1021 = vpop.permute.xlu0 %1020
    %1022 = vrot.lane.b32.xlu0 %v196, 8
    %v1023 = vpop.permute.xlu0 %1022
    %1024 = vrot.lane.b32.xlu0 %v197, 8
    %v1025 = vpop.permute.xlu0 %1024
    %1026 = vrot.lane.b32.xlu0 %v198, 8
    %v1027 = vpop.permute.xlu0 %1026
    %1028 = vrot.lane.b32.xlu0 %v199, 8
    %v1029 = vpop.permute.xlu0 %1028
    %1030 = vrot.lane.b32.xlu0 %v200, 8
    %v1031 = vpop.permute.xlu0 %1030
    %1032 = vrot.lane.b32.xlu0 %v201, 8
    %v1033 = vpop.permute.xlu0 %1032
    %1034 = vrot.lane.b32.xlu0 %v202, 8
    %v1035 = vpop.permute.xlu0 %1034
    %1036 = vrot.lane.b32.xlu0 %v203, 8
    %v1037 = vpop.permute.xlu0 %1036
    %1166 = vrot.lane.b32.xlu0 %v205, 12
    %v1167 = vpop.permute.xlu0 %1166
    %1168 = vrot.lane.b32.xlu0 %v206, 12
    %v1169 = vpop.permute.xlu0 %1168
    %1170 = vrot.lane.b32.xlu0 %v207, 12
    %v1171 = vpop.permute.xlu0 %1170
    %1172 = vrot.lane.b32.xlu0 %v208, 12
    %v1173 = vpop.permute.xlu0 %1172
    %1174 = vrot.lane.b32.xlu0 %v209, 12
    %v1175 = vpop.permute.xlu0 %1174
    %1176 = vrot.lane.b32.xlu0 %v210, 12
    %v1177 = vpop.permute.xlu0 %1176
    %1178 = vrot.lane.b32.xlu0 %v211, 12
    %v1179 = vpop.permute.xlu0 %1178
    %1180 = vrot.lane.b32.xlu0 %v212, 12
    %v1181 = vpop.permute.xlu0 %1180
    %1182 = vrot.lane.b32.xlu0 %v213, 12
    %v1183 = vpop.permute.xlu0 %1182
    %1184 = vrot.lane.b32.xlu0 %v214, 12
    %v1185 = vpop.permute.xlu0 %1184
    %1186 = vrot.lane.b32.xlu0 %v215, 12
    %v1187 = vpop.permute.xlu0 %1186
    %1188 = vrot.lane.b32.xlu0 %v216, 12
    %v1189 = vpop.permute.xlu0 %1188
    %1190 = vrot.lane.b32.xlu0 %v217, 12
    %v1191 = vpop.permute.xlu0 %1190
    %1192 = vrot.lane.b32.xlu0 %v218, 12
    %v1193 = vpop.permute.xlu0 %1192
    %1194 = vrot.lane.b32.xlu0 %v219, 12
    %v1195 = vpop.permute.xlu0 %1194
    %1196 = vrot.lane.b32.xlu0 %v220, 12
    %v1197 = vpop.permute.xlu0 %1196
    %1198 = vrot.lane.b32.xlu0 %v221, 12
    %v1199 = vpop.permute.xlu0 %1198
    %1200 = vrot.lane.b32.xlu0 %v222, 12
    %v1201 = vpop.permute.xlu0 %1200
    %1202 = vrot.lane.b32.xlu0 %v223, 12
    %v1203 = vpop.permute.xlu0 %1202
    %1204 = vrot.lane.b32.xlu0 %v224, 12
    %v1205 = vpop.permute.xlu0 %1204
    %1206 = vrot.lane.b32.xlu0 %v225, 12
    %v1207 = vpop.permute.xlu0 %1206
    %1208 = vrot.lane.b32.xlu0 %v226, 12
    %v1209 = vpop.permute.xlu0 %1208
    %1210 = vrot.lane.b32.xlu0 %v227, 12
    %v1211 = vpop.permute.xlu0 %1210
    %1212 = vrot.lane.b32.xlu0 %v228, 12
    %v1213 = vpop.permute.xlu0 %1212
    %1214 = vrot.lane.b32.xlu0 %v229, 12
    %v1215 = vpop.permute.xlu0 %1214
    %1216 = vrot.lane.b32.xlu0 %v230, 12
    %v1217 = vpop.permute.xlu0 %1216
    %1218 = vrot.lane.b32.xlu0 %v231, 12
    %v1219 = vpop.permute.xlu0 %1218
    %1220 = vrot.lane.b32.xlu0 %v232, 12
    %v1221 = vpop.permute.xlu0 %1220
    %1222 = vrot.lane.b32.xlu0 %v233, 12
    %v1223 = vpop.permute.xlu0 %1222
    %1224 = vrot.lane.b32.xlu0 %v234, 12
    %v1225 = vpop.permute.xlu0 %1224
    %1226 = vrot.lane.b32.xlu0 %v235, 12
    %v1227 = vpop.permute.xlu0 %1226
    %1228 = vrot.lane.b32.xlu0 %v236, 12
    %v1229 = vpop.permute.xlu0 %1228
    %1230 = vrot.lane.b32.xlu0 %v237, 12
    %v1231 = vpop.permute.xlu0 %1230
    %1232 = vrot.lane.b32.xlu0 %v238, 12
    %v1233 = vpop.permute.xlu0 %1232
    %1234 = vrot.lane.b32.xlu0 %v239, 12
    %v1235 = vpop.permute.xlu0 %1234
    %1236 = vrot.lane.b32.xlu0 %v240, 12
    %v1237 = vpop.permute.xlu0 %1236
    %1238 = vrot.lane.b32.xlu0 %v241, 12
    %v1239 = vpop.permute.xlu0 %1238
    %1240 = vrot.lane.b32.xlu0 %v242, 12
    %v1241 = vpop.permute.xlu0 %1240
    %1242 = vrot.lane.b32.xlu0 %v243, 12
    %v1243 = vpop.permute.xlu0 %1242
    %1244 = vrot.lane.b32.xlu0 %v244, 12
    %v1245 = vpop.permute.xlu0 %1244
    %1246 = vrot.lane.b32.xlu0 %v245, 12
    %v1247 = vpop.permute.xlu0 %1246
    %1248 = vrot.lane.b32.xlu0 %v246, 12
    %v1249 = vpop.permute.xlu0 %1248
    %1250 = vrot.lane.b32.xlu0 %v247, 12
    %v1251 = vpop.permute.xlu0 %1250
    %1252 = vrot.lane.b32.xlu0 %v248, 12
    %v1253 = vpop.permute.xlu0 %1252
    %1254 = vrot.lane.b32.xlu0 %v249, 12
    %v1255 = vpop.permute.xlu0 %1254
    %1256 = vrot.lane.b32.xlu0 %v250, 12
    %v1257 = vpop.permute.xlu0 %1256
    %1258 = vrot.lane.b32.xlu0 %v251, 12
    %v1259 = vpop.permute.xlu0 %1258
    %1260 = vrot.lane.b32.xlu0 %v252, 12
    %v1261 = vpop.permute.xlu0 %1260
    %1262 = vrot.lane.b32.xlu0 %v253, 12
    %v1263 = vpop.permute.xlu0 %1262
    %1264 = vrot.lane.b32.xlu0 %v254, 12
    %v1265 = vpop.permute.xlu0 %1264
    %1266 = vrot.lane.b32.xlu0 %v255, 12
    %v1267 = vpop.permute.xlu0 %1266
    %1268 = vrot.lane.b32.xlu0 %v256, 12
    %v1269 = vpop.permute.xlu0 %1268
    %1270 = vrot.lane.b32.xlu0 %v257, 12
    %v1271 = vpop.permute.xlu0 %1270
    %1272 = vrot.lane.b32.xlu0 %v258, 12
    %v1273 = vpop.permute.xlu0 %1272
    %1274 = vrot.lane.b32.xlu0 %v259, 12
    %v1275 = vpop.permute.xlu0 %1274
    %1276 = vrot.lane.b32.xlu0 %v260, 12
    %v1277 = vpop.permute.xlu0 %1276
    %1278 = vrot.lane.b32.xlu0 %v261, 12
    %v1279 = vpop.permute.xlu0 %1278
    %1280 = vrot.lane.b32.xlu0 %v262, 12
    %v1281 = vpop.permute.xlu0 %1280
    %1282 = vrot.lane.b32.xlu0 %v263, 12
    %v1283 = vpop.permute.xlu0 %1282
    %1284 = vrot.lane.b32.xlu0 %v264, 12
    %v1285 = vpop.permute.xlu0 %1284
    %1286 = vrot.lane.b32.xlu0 %v265, 12
    %v1287 = vpop.permute.xlu0 %1286
    %1288 = vrot.lane.b32.xlu0 %v266, 12
    %v1289 = vpop.permute.xlu0 %1288
    %1290 = vrot.lane.b32.xlu0 %v267, 12
    %v1291 = vpop.permute.xlu0 %1290
    %1292 = vrot.lane.b32.xlu0 %v268, 12
    %v1293 = vpop.permute.xlu0 %1292
    %1422 = vrot.lane.b32.xlu0 %v269, 16
    %v1423 = vpop.permute.xlu0 %1422
    %1424 = vrot.lane.b32.xlu0 %v270, 16
    %v1425 = vpop.permute.xlu0 %1424
    %1426 = vrot.lane.b32.xlu0 %v271, 16
    %v1427 = vpop.permute.xlu0 %1426
    %1428 = vrot.lane.b32.xlu0 %v272, 16
    %v1429 = vpop.permute.xlu0 %1428
    %1430 = vrot.lane.b32.xlu0 %v273, 16
    %v1431 = vpop.permute.xlu0 %1430
    %1432 = vrot.lane.b32.xlu0 %v274, 16
    %v1433 = vpop.permute.xlu0 %1432
    %1434 = vrot.lane.b32.xlu0 %v275, 16
    %v1435 = vpop.permute.xlu0 %1434
    %1436 = vrot.lane.b32.xlu0 %v276, 16
    %v1437 = vpop.permute.xlu0 %1436
    %1438 = vrot.lane.b32.xlu0 %v277, 16
    %v1439 = vpop.permute.xlu0 %1438
    %1440 = vrot.lane.b32.xlu0 %v278, 16
    %v1441 = vpop.permute.xlu0 %1440
    %1442 = vrot.lane.b32.xlu0 %v279, 16
    %v1443 = vpop.permute.xlu0 %1442
    %1444 = vrot.lane.b32.xlu0 %v280, 16
    %v1445 = vpop.permute.xlu0 %1444
    %1446 = vrot.lane.b32.xlu0 %v281, 16
    %v1447 = vpop.permute.xlu0 %1446
    %1448 = vrot.lane.b32.xlu0 %v282, 16
    %v1449 = vpop.permute.xlu0 %1448
    %1450 = vrot.lane.b32.xlu0 %v283, 16
    %v1451 = vpop.permute.xlu0 %1450
    %1452 = vrot.lane.b32.xlu0 %v284, 16
    %v1453 = vpop.permute.xlu0 %1452
    %1454 = vrot.lane.b32.xlu0 %v285, 16
    %v1455 = vpop.permute.xlu0 %1454
    %1456 = vrot.lane.b32.xlu0 %v286, 16
    %v1457 = vpop.permute.xlu0 %1456
    %1458 = vrot.lane.b32.xlu0 %v287, 16
    %v1459 = vpop.permute.xlu0 %1458
    %1460 = vrot.lane.b32.xlu0 %v288, 16
    %v1461 = vpop.permute.xlu0 %1460
    %1462 = vrot.lane.b32.xlu0 %v289, 16
    %v1463 = vpop.permute.xlu0 %1462
    %1464 = vrot.lane.b32.xlu0 %v290, 16
    %v1465 = vpop.permute.xlu0 %1464
    %1466 = vrot.lane.b32.xlu0 %v291, 16
    %v1467 = vpop.permute.xlu0 %1466
    %1468 = vrot.lane.b32.xlu0 %v292, 16
    %v1469 = vpop.permute.xlu0 %1468
    %1470 = vrot.lane.b32.xlu0 %v293, 16
    %v1471 = vpop.permute.xlu0 %1470
    %1472 = vrot.lane.b32.xlu0 %v294, 16
    %v1473 = vpop.permute.xlu0 %1472
    %1474 = vrot.lane.b32.xlu0 %v295, 16
    %v1475 = vpop.permute.xlu0 %1474
    %1476 = vrot.lane.b32.xlu0 %v296, 16
    %v1477 = vpop.permute.xlu0 %1476
    %1478 = vrot.lane.b32.xlu0 %v297, 16
    %v1479 = vpop.permute.xlu0 %1478
    %1480 = vrot.lane.b32.xlu0 %v298, 16
    %v1481 = vpop.permute.xlu0 %1480
    %1482 = vrot.lane.b32.xlu0 %v299, 16
    %v1483 = vpop.permute.xlu0 %1482
    %1484 = vrot.lane.b32.xlu0 %v300, 16
    %v1485 = vpop.permute.xlu0 %1484
    %1486 = vrot.lane.b32.xlu0 %v301, 16
    %v1487 = vpop.permute.xlu0 %1486
    %1488 = vrot.lane.b32.xlu0 %v302, 16
    %v1489 = vpop.permute.xlu0 %1488
    %1490 = vrot.lane.b32.xlu0 %v303, 16
    %v1491 = vpop.permute.xlu0 %1490
    %1492 = vrot.lane.b32.xlu0 %v304, 16
    %v1493 = vpop.permute.xlu0 %1492
    %1494 = vrot.lane.b32.xlu0 %v305, 16
    %v1495 = vpop.permute.xlu0 %1494
    %1496 = vrot.lane.b32.xlu0 %v306, 16
    %v1497 = vpop.permute.xlu0 %1496
    %1498 = vrot.lane.b32.xlu0 %v307, 16
    %v1499 = vpop.permute.xlu0 %1498
    %1500 = vrot.lane.b32.xlu0 %v308, 16
    %v1501 = vpop.permute.xlu0 %1500
    %1502 = vrot.lane.b32.xlu0 %v309, 16
    %v1503 = vpop.permute.xlu0 %1502
    %1504 = vrot.lane.b32.xlu0 %v310, 16
    %v1505 = vpop.permute.xlu0 %1504
    %1506 = vrot.lane.b32.xlu0 %v311, 16
    %v1507 = vpop.permute.xlu0 %1506
    %1508 = vrot.lane.b32.xlu0 %v312, 16
    %v1509 = vpop.permute.xlu0 %1508
    %1510 = vrot.lane.b32.xlu0 %v313, 16
    %v1511 = vpop.permute.xlu0 %1510
    %1512 = vrot.lane.b32.xlu0 %v314, 16
    %v1513 = vpop.permute.xlu0 %1512
    %1514 = vrot.lane.b32.xlu0 %v315, 16
    %v1515 = vpop.permute.xlu0 %1514
    %1516 = vrot.lane.b32.xlu0 %v316, 16
    %v1517 = vpop.permute.xlu0 %1516
    %1518 = vrot.lane.b32.xlu0 %v317, 16
    %v1519 = vpop.permute.xlu0 %1518
    %1520 = vrot.lane.b32.xlu0 %v318, 16
    %v1521 = vpop.permute.xlu0 %1520
    %1522 = vrot.lane.b32.xlu0 %v319, 16
    %v1523 = vpop.permute.xlu0 %1522
    %1524 = vrot.lane.b32.xlu0 %v320, 16
    %v1525 = vpop.permute.xlu0 %1524
    %1526 = vrot.lane.b32.xlu0 %v321, 16
    %v1527 = vpop.permute.xlu0 %1526
    %1528 = vrot.lane.b32.xlu0 %v322, 16
    %v1529 = vpop.permute.xlu0 %1528
    %1530 = vrot.lane.b32.xlu0 %v323, 16
    %v1531 = vpop.permute.xlu0 %1530
    %1532 = vrot.lane.b32.xlu0 %v324, 16
    %v1533 = vpop.permute.xlu0 %1532
    %1534 = vrot.lane.b32.xlu0 %v325, 16
    %v1535 = vpop.permute.xlu0 %1534
    %1536 = vrot.lane.b32.xlu0 %v326, 16
    %v1537 = vpop.permute.xlu0 %1536
    %1538 = vrot.lane.b32.xlu0 %v327, 16
    %v1539 = vpop.permute.xlu0 %1538
    %1540 = vrot.lane.b32.xlu0 %v328, 16
    %v1541 = vpop.permute.xlu0 %1540
    %1542 = vrot.lane.b32.xlu0 %v329, 16
    %v1543 = vpop.permute.xlu0 %1542
    %1544 = vrot.lane.b32.xlu0 %v330, 16
    %v1545 = vpop.permute.xlu0 %1544
    %1546 = vrot.lane.b32.xlu0 %v331, 16
    %v1547 = vpop.permute.xlu0 %1546
    %1548 = vrot.lane.b32.xlu0 %v332, 16
    %v1549 = vpop.permute.xlu0 %1548
    %1678 = vrot.lane.b32.xlu0 %v333, 20
    %v1679 = vpop.permute.xlu0 %1678
    %1680 = vrot.lane.b32.xlu0 %v334, 20
    %v1681 = vpop.permute.xlu0 %1680
    %1682 = vrot.lane.b32.xlu0 %v335, 20
    %v1683 = vpop.permute.xlu0 %1682
    %1684 = vrot.lane.b32.xlu0 %v336, 20
    %v1685 = vpop.permute.xlu0 %1684
    %1686 = vrot.lane.b32.xlu0 %v337, 20
    %v1687 = vpop.permute.xlu0 %1686
    %1688 = vrot.lane.b32.xlu0 %v338, 20
    %v1689 = vpop.permute.xlu0 %1688
    %1690 = vrot.lane.b32.xlu0 %v339, 20
    %v1691 = vpop.permute.xlu0 %1690
    %1692 = vrot.lane.b32.xlu0 %v340, 20
    %v1693 = vpop.permute.xlu0 %1692
    %1694 = vrot.lane.b32.xlu0 %v341, 20
    %v1695 = vpop.permute.xlu0 %1694
    %1696 = vrot.lane.b32.xlu0 %v342, 20
    %v1697 = vpop.permute.xlu0 %1696
    %1698 = vrot.lane.b32.xlu0 %v343, 20
    %v1699 = vpop.permute.xlu0 %1698
    %1700 = vrot.lane.b32.xlu0 %v344, 20
    %v1701 = vpop.permute.xlu0 %1700
    %1702 = vrot.lane.b32.xlu0 %v345, 20
    %v1703 = vpop.permute.xlu0 %1702
    %1704 = vrot.lane.b32.xlu0 %v346, 20
    %v1705 = vpop.permute.xlu0 %1704
    %1706 = vrot.lane.b32.xlu0 %v347, 20
    %v1707 = vpop.permute.xlu0 %1706
    %1708 = vrot.lane.b32.xlu0 %v348, 20
    %v1709 = vpop.permute.xlu0 %1708
    %1710 = vrot.lane.b32.xlu0 %v349, 20
    %v1711 = vpop.permute.xlu0 %1710
    %1712 = vrot.lane.b32.xlu0 %v350, 20
    %v1713 = vpop.permute.xlu0 %1712
    %1714 = vrot.lane.b32.xlu0 %v351, 20
    %v1715 = vpop.permute.xlu0 %1714
    %1716 = vrot.lane.b32.xlu0 %v352, 20
    %v1717 = vpop.permute.xlu0 %1716
    %1718 = vrot.lane.b32.xlu0 %v353, 20
    %v1719 = vpop.permute.xlu0 %1718
    %1720 = vrot.lane.b32.xlu0 %v354, 20
    %v1721 = vpop.permute.xlu0 %1720
    %1722 = vrot.lane.b32.xlu0 %v355, 20
    %v1723 = vpop.permute.xlu0 %1722
    %1724 = vrot.lane.b32.xlu0 %v356, 20
    %v1725 = vpop.permute.xlu0 %1724
    %1726 = vrot.lane.b32.xlu0 %v357, 20
    %v1727 = vpop.permute.xlu0 %1726
    %1728 = vrot.lane.b32.xlu0 %v358, 20
    %v1729 = vpop.permute.xlu0 %1728
    %1730 = vrot.lane.b32.xlu0 %v359, 20
    %v1731 = vpop.permute.xlu0 %1730
    %1732 = vrot.lane.b32.xlu0 %v360, 20
    %v1733 = vpop.permute.xlu0 %1732
    %1734 = vrot.lane.b32.xlu0 %v361, 20
    %v1735 = vpop.permute.xlu0 %1734
    %1736 = vrot.lane.b32.xlu0 %v362, 20
    %v1737 = vpop.permute.xlu0 %1736
    %1738 = vrot.lane.b32.xlu0 %v363, 20
    %v1739 = vpop.permute.xlu0 %1738
    %1740 = vrot.lane.b32.xlu0 %v364, 20
    %v1741 = vpop.permute.xlu0 %1740
    %1742 = vrot.lane.b32.xlu0 %v365, 20
    %v1743 = vpop.permute.xlu0 %1742
    %1744 = vrot.lane.b32.xlu0 %v366, 20
    %v1745 = vpop.permute.xlu0 %1744
    %1746 = vrot.lane.b32.xlu0 %v367, 20
    %v1747 = vpop.permute.xlu0 %1746
    %1748 = vrot.lane.b32.xlu0 %v368, 20
    %v1749 = vpop.permute.xlu0 %1748
    %1750 = vrot.lane.b32.xlu0 %v369, 20
    %v1751 = vpop.permute.xlu0 %1750
    %1752 = vrot.lane.b32.xlu0 %v370, 20
    %v1753 = vpop.permute.xlu0 %1752
    %1754 = vrot.lane.b32.xlu0 %v371, 20
    %v1755 = vpop.permute.xlu0 %1754
    %1756 = vrot.lane.b32.xlu0 %v372, 20
    %v1757 = vpop.permute.xlu0 %1756
    %1758 = vrot.lane.b32.xlu0 %v373, 20
    %v1759 = vpop.permute.xlu0 %1758
    %1760 = vrot.lane.b32.xlu0 %v374, 20
    %v1761 = vpop.permute.xlu0 %1760
    %1762 = vrot.lane.b32.xlu0 %v375, 20
    %v1763 = vpop.permute.xlu0 %1762
    %1764 = vrot.lane.b32.xlu0 %v376, 20
    %v1765 = vpop.permute.xlu0 %1764
    %1766 = vrot.lane.b32.xlu0 %v377, 20
    %v1767 = vpop.permute.xlu0 %1766
    %1768 = vrot.lane.b32.xlu0 %v378, 20
    %v1769 = vpop.permute.xlu0 %1768
    %1770 = vrot.lane.b32.xlu0 %v379, 20
    %v1771 = vpop.permute.xlu0 %1770
    %1772 = vrot.lane.b32.xlu0 %v380, 20
    %v1773 = vpop.permute.xlu0 %1772
    %1774 = vrot.lane.b32.xlu0 %v381, 20
    %v1775 = vpop.permute.xlu0 %1774
    %1776 = vrot.lane.b32.xlu0 %v382, 20
    %v1777 = vpop.permute.xlu0 %1776
    %1778 = vrot.lane.b32.xlu0 %v383, 20
    %v1779 = vpop.permute.xlu0 %1778
    %1780 = vrot.lane.b32.xlu0 %v384, 20
    %v1781 = vpop.permute.xlu0 %1780
    %1782 = vrot.lane.b32.xlu0 %v385, 20
    %v1783 = vpop.permute.xlu0 %1782
    %1784 = vrot.lane.b32.xlu0 %v386, 20
    %v1785 = vpop.permute.xlu0 %1784
    %1786 = vrot.lane.b32.xlu0 %v387, 20
    %v1787 = vpop.permute.xlu0 %1786
    %1788 = vrot.lane.b32.xlu0 %v388, 20
    %v1789 = vpop.permute.xlu0 %1788
    %1790 = vrot.lane.b32.xlu0 %v389, 20
    %v1791 = vpop.permute.xlu0 %1790
    %1792 = vrot.lane.b32.xlu0 %v390, 20
    %v1793 = vpop.permute.xlu0 %1792
    %1794 = vrot.lane.b32.xlu0 %v391, 20
    %v1795 = vpop.permute.xlu0 %1794
    %1796 = vrot.lane.b32.xlu0 %v392, 20
    %v1797 = vpop.permute.xlu0 %1796
    %1798 = vrot.lane.b32.xlu0 %v393, 20
    %v1799 = vpop.permute.xlu0 %1798
    %1800 = vrot.lane.b32.xlu0 %v394, 20
    %v1801 = vpop.permute.xlu0 %1800
    %1802 = vrot.lane.b32.xlu0 %v395, 20
    %v1803 = vpop.permute.xlu0 %1802
    %1804 = vrot.lane.b32.xlu0 %v396, 20
    %v1805 = vpop.permute.xlu0 %1804
    %1934 = vrot.lane.b32.xlu0 %v398, 24
    %v1935 = vpop.permute.xlu0 %1934
    %1936 = vrot.lane.b32.xlu0 %v399, 24
    %v1937 = vpop.permute.xlu0 %1936
    %1938 = vrot.lane.b32.xlu0 %v400, 24
    %v1939 = vpop.permute.xlu0 %1938
    %1940 = vrot.lane.b32.xlu0 %v401, 24
    %v1941 = vpop.permute.xlu0 %1940
    %1942 = vrot.lane.b32.xlu0 %v402, 24
    %v1943 = vpop.permute.xlu0 %1942
    %1944 = vrot.lane.b32.xlu0 %v403, 24
    %v1945 = vpop.permute.xlu0 %1944
    %1946 = vrot.lane.b32.xlu0 %v404, 24
    %v1947 = vpop.permute.xlu0 %1946
    %1948 = vrot.lane.b32.xlu0 %v405, 24
    %v1949 = vpop.permute.xlu0 %1948
    %1950 = vrot.lane.b32.xlu0 %v406, 24
    %v1951 = vpop.permute.xlu0 %1950
    %1952 = vrot.lane.b32.xlu0 %v407, 24
    %v1953 = vpop.permute.xlu0 %1952
    %1954 = vrot.lane.b32.xlu0 %v408, 24
    %v1955 = vpop.permute.xlu0 %1954
    %1956 = vrot.lane.b32.xlu0 %v409, 24
    %v1957 = vpop.permute.xlu0 %1956
    %1958 = vrot.lane.b32.xlu0 %v410, 24
    %v1959 = vpop.permute.xlu0 %1958
    %1960 = vrot.lane.b32.xlu0 %v411, 24
    %v1961 = vpop.permute.xlu0 %1960
    %1962 = vrot.lane.b32.xlu0 %v412, 24
    %v1963 = vpop.permute.xlu0 %1962
    %1964 = vrot.lane.b32.xlu0 %v413, 24
    %v1965 = vpop.permute.xlu0 %1964
    %1966 = vrot.lane.b32.xlu0 %v414, 24
    %v1967 = vpop.permute.xlu0 %1966
    %1968 = vrot.lane.b32.xlu0 %v415, 24
    %v1969 = vpop.permute.xlu0 %1968
    %1970 = vrot.lane.b32.xlu0 %v416, 24
    %v1971 = vpop.permute.xlu0 %1970
    %1972 = vrot.lane.b32.xlu0 %v417, 24
    %v1973 = vpop.permute.xlu0 %1972
    %1974 = vrot.lane.b32.xlu0 %v418, 24
    %v1975 = vpop.permute.xlu0 %1974
    %1976 = vrot.lane.b32.xlu0 %v419, 24
    %v1977 = vpop.permute.xlu0 %1976
    %1978 = vrot.lane.b32.xlu0 %v420, 24
    %v1979 = vpop.permute.xlu0 %1978
    %1980 = vrot.lane.b32.xlu0 %v421, 24
    %v1981 = vpop.permute.xlu0 %1980
    %1982 = vrot.lane.b32.xlu0 %v422, 24
    %v1983 = vpop.permute.xlu0 %1982
    %1984 = vrot.lane.b32.xlu0 %v423, 24
    %v1985 = vpop.permute.xlu0 %1984
    %1986 = vrot.lane.b32.xlu0 %v424, 24
    %v1987 = vpop.permute.xlu0 %1986
    %1988 = vrot.lane.b32.xlu0 %v425, 24
    %v1989 = vpop.permute.xlu0 %1988
    %1990 = vrot.lane.b32.xlu0 %v426, 24
    %v1991 = vpop.permute.xlu0 %1990
    %1992 = vrot.lane.b32.xlu0 %v427, 24
    %v1993 = vpop.permute.xlu0 %1992
    %1994 = vrot.lane.b32.xlu0 %v428, 24
    %v1995 = vpop.permute.xlu0 %1994
    %1996 = vrot.lane.b32.xlu0 %v429, 24
    %v1997 = vpop.permute.xlu0 %1996
    %1998 = vrot.lane.b32.xlu0 %v430, 24
    %v1999 = vpop.permute.xlu0 %1998
    %2000 = vrot.lane.b32.xlu0 %v431, 24
    %v2001 = vpop.permute.xlu0 %2000
    %2002 = vrot.lane.b32.xlu0 %v432, 24
    %v2003 = vpop.permute.xlu0 %2002
    %2004 = vrot.lane.b32.xlu0 %v433, 24
    %v2005 = vpop.permute.xlu0 %2004
    %2006 = vrot.lane.b32.xlu0 %v434, 24
    %v2007 = vpop.permute.xlu0 %2006
    %2008 = vrot.lane.b32.xlu0 %v435, 24
    %v2009 = vpop.permute.xlu0 %2008
    %2010 = vrot.lane.b32.xlu0 %v436, 24
    %v2011 = vpop.permute.xlu0 %2010
    %2012 = vrot.lane.b32.xlu0 %v437, 24
    %v2013 = vpop.permute.xlu0 %2012
    %2014 = vrot.lane.b32.xlu0 %v438, 24
    %v2015 = vpop.permute.xlu0 %2014
    %2016 = vrot.lane.b32.xlu0 %v439, 24
    %v2017 = vpop.permute.xlu0 %2016
    %2018 = vrot.lane.b32.xlu0 %v440, 24
    %v2019 = vpop.permute.xlu0 %2018
    %2020 = vrot.lane.b32.xlu0 %v441, 24
    %v2021 = vpop.permute.xlu0 %2020
    %2022 = vrot.lane.b32.xlu0 %v442, 24
    %v2023 = vpop.permute.xlu0 %2022
    %2024 = vrot.lane.b32.xlu0 %v443, 24
    %v2025 = vpop.permute.xlu0 %2024
    %2026 = vrot.lane.b32.xlu0 %v444, 24
    %v2027 = vpop.permute.xlu0 %2026
    %2028 = vrot.lane.b32.xlu0 %v445, 24
    %v2029 = vpop.permute.xlu0 %2028
    %2030 = vrot.lane.b32.xlu0 %v446, 24
    %v2031 = vpop.permute.xlu0 %2030
    %2032 = vrot.lane.b32.xlu0 %v447, 24
    %v2033 = vpop.permute.xlu0 %2032
    %2034 = vrot.lane.b32.xlu0 %v448, 24
    %v2035 = vpop.permute.xlu0 %2034
    %2036 = vrot.lane.b32.xlu0 %v449, 24
    %v2037 = vpop.permute.xlu0 %2036
    %2038 = vrot.lane.b32.xlu0 %v450, 24
    %v2039 = vpop.permute.xlu0 %2038
    %2040 = vrot.lane.b32.xlu0 %v451, 24
    %v2041 = vpop.permute.xlu0 %2040
    %2042 = vrot.lane.b32.xlu0 %v452, 24
    %v2043 = vpop.permute.xlu0 %2042
    %2044 = vrot.lane.b32.xlu0 %v453, 24
    %v2045 = vpop.permute.xlu0 %2044
    %2046 = vrot.lane.b32.xlu0 %v454, 24
    %v2047 = vpop.permute.xlu0 %2046
    %2048 = vrot.lane.b32.xlu0 %v455, 24
    %v2049 = vpop.permute.xlu0 %2048
    %2050 = vrot.lane.b32.xlu0 %v456, 24
    %v2051 = vpop.permute.xlu0 %2050
    %2052 = vrot.lane.b32.xlu0 %v457, 24
    %v2053 = vpop.permute.xlu0 %2052
    %2054 = vrot.lane.b32.xlu0 %v458, 24
    %v2055 = vpop.permute.xlu0 %2054
    %2056 = vrot.lane.b32.xlu0 %v459, 24
    %v2057 = vpop.permute.xlu0 %2056
    %2058 = vrot.lane.b32.xlu0 %v460, 24
    %v2059 = vpop.permute.xlu0 %2058
    %2060 = vrot.lane.b32.xlu0 %v461, 24
    %v2061 = vpop.permute.xlu0 %2060
    %2190 = vrot.lane.b32.xlu0 %v462, 28
    %v2191 = vpop.permute.xlu0 %2190
    %2192 = vrot.lane.b32.xlu0 %v463, 28
    %v2193 = vpop.permute.xlu0 %2192
    %2194 = vrot.lane.b32.xlu0 %v464, 28
    %v2195 = vpop.permute.xlu0 %2194
    %2196 = vrot.lane.b32.xlu0 %v465, 28
    %v2197 = vpop.permute.xlu0 %2196
    %2198 = vrot.lane.b32.xlu0 %v466, 28
    %v2199 = vpop.permute.xlu0 %2198
    %2200 = vrot.lane.b32.xlu0 %v467, 28
    %v2201 = vpop.permute.xlu0 %2200
    %2202 = vrot.lane.b32.xlu0 %v468, 28
    %v2203 = vpop.permute.xlu0 %2202
    %2204 = vrot.lane.b32.xlu0 %v469, 28
    %v2205 = vpop.permute.xlu0 %2204
    %2206 = vrot.lane.b32.xlu0 %v470, 28
    %v2207 = vpop.permute.xlu0 %2206
    %2208 = vrot.lane.b32.xlu0 %v471, 28
    %v2209 = vpop.permute.xlu0 %2208
    %2210 = vrot.lane.b32.xlu0 %v472, 28
    %v2211 = vpop.permute.xlu0 %2210
    %2212 = vrot.lane.b32.xlu0 %v473, 28
    %v2213 = vpop.permute.xlu0 %2212
    %2214 = vrot.lane.b32.xlu0 %v474, 28
    %v2215 = vpop.permute.xlu0 %2214
    %2216 = vrot.lane.b32.xlu0 %v475, 28
    %v2217 = vpop.permute.xlu0 %2216
    %2218 = vrot.lane.b32.xlu0 %v476, 28
    %v2219 = vpop.permute.xlu0 %2218
    %2220 = vrot.lane.b32.xlu0 %v477, 28
    %v2221 = vpop.permute.xlu0 %2220
    %2222 = vrot.lane.b32.xlu0 %v478, 28
    %v2223 = vpop.permute.xlu0 %2222
    %2224 = vrot.lane.b32.xlu0 %v479, 28
    %v2225 = vpop.permute.xlu0 %2224
    %2226 = vrot.lane.b32.xlu0 %v480, 28
    %v2227 = vpop.permute.xlu0 %2226
    %2228 = vrot.lane.b32.xlu0 %v481, 28
    %v2229 = vpop.permute.xlu0 %2228
    %2230 = vrot.lane.b32.xlu0 %v482, 28
    %v2231 = vpop.permute.xlu0 %2230
    %2232 = vrot.lane.b32.xlu0 %v483, 28
    %v2233 = vpop.permute.xlu0 %2232
    %2234 = vrot.lane.b32.xlu0 %v484, 28
    %v2235 = vpop.permute.xlu0 %2234
    %2236 = vrot.lane.b32.xlu0 %v485, 28
    %v2237 = vpop.permute.xlu0 %2236
    %2238 = vrot.lane.b32.xlu0 %v486, 28
    %v2239 = vpop.permute.xlu0 %2238
    %2240 = vrot.lane.b32.xlu0 %v487, 28
    %v2241 = vpop.permute.xlu0 %2240
    %2242 = vrot.lane.b32.xlu0 %v488, 28
    %v2243 = vpop.permute.xlu0 %2242
    %2244 = vrot.lane.b32.xlu0 %v489, 28
    %v2245 = vpop.permute.xlu0 %2244
    %2246 = vrot.lane.b32.xlu0 %v490, 28
    %v2247 = vpop.permute.xlu0 %2246
    %2248 = vrot.lane.b32.xlu0 %v491, 28
    %v2249 = vpop.permute.xlu0 %2248
    %2250 = vrot.lane.b32.xlu0 %v492, 28
    %v2251 = vpop.permute.xlu0 %2250
    %2252 = vrot.lane.b32.xlu0 %v493, 28
    %v2253 = vpop.permute.xlu0 %2252
    %2254 = vrot.lane.b32.xlu0 %v494, 28
    %v2255 = vpop.permute.xlu0 %2254
    %2256 = vrot.lane.b32.xlu0 %v495, 28
    %v2257 = vpop.permute.xlu0 %2256
    %2258 = vrot.lane.b32.xlu0 %v496, 28
    %v2259 = vpop.permute.xlu0 %2258
    %2260 = vrot.lane.b32.xlu0 %v497, 28
    %v2261 = vpop.permute.xlu0 %2260
    %2262 = vrot.lane.b32.xlu0 %v498, 28
    %v2263 = vpop.permute.xlu0 %2262
    %2264 = vrot.lane.b32.xlu0 %v499, 28
    %v2265 = vpop.permute.xlu0 %2264
    %2266 = vrot.lane.b32.xlu0 %v500, 28
    %v2267 = vpop.permute.xlu0 %2266
    %2268 = vrot.lane.b32.xlu0 %v501, 28
    %v2269 = vpop.permute.xlu0 %2268
    %2270 = vrot.lane.b32.xlu0 %v502, 28
    %v2271 = vpop.permute.xlu0 %2270
    %2272 = vrot.lane.b32.xlu0 %v503, 28
    %v2273 = vpop.permute.xlu0 %2272
    %2274 = vrot.lane.b32.xlu0 %v504, 28
    %v2275 = vpop.permute.xlu0 %2274
    %2276 = vrot.lane.b32.xlu0 %v505, 28
    %v2277 = vpop.permute.xlu0 %2276
    %2278 = vrot.lane.b32.xlu0 %v506, 28
    %v2279 = vpop.permute.xlu0 %2278
    %2280 = vrot.lane.b32.xlu0 %v507, 28
    %v2281 = vpop.permute.xlu0 %2280
    %2282 = vrot.lane.b32.xlu0 %v508, 28
    %v2283 = vpop.permute.xlu0 %2282
    %2284 = vrot.lane.b32.xlu0 %v509, 28
    %v2285 = vpop.permute.xlu0 %2284
    %2286 = vrot.lane.b32.xlu0 %v510, 28
    %v2287 = vpop.permute.xlu0 %2286
    %2288 = vrot.lane.b32.xlu0 %v511, 28
    %v2289 = vpop.permute.xlu0 %2288
    %2290 = vrot.lane.b32.xlu0 %v512, 28
    %v2291 = vpop.permute.xlu0 %2290
    %2292 = vrot.lane.b32.xlu0 %v513, 28
    %v2293 = vpop.permute.xlu0 %2292
    %2294 = vrot.lane.b32.xlu0 %v514, 28
    %v2295 = vpop.permute.xlu0 %2294
    %2296 = vrot.lane.b32.xlu0 %v515, 28
    %v2297 = vpop.permute.xlu0 %2296
    %2298 = vrot.lane.b32.xlu0 %v516, 28
    %v2299 = vpop.permute.xlu0 %2298
    %2300 = vrot.lane.b32.xlu0 %v517, 28
    %v2301 = vpop.permute.xlu0 %2300
    %2302 = vrot.lane.b32.xlu0 %v518, 28
    %v2303 = vpop.permute.xlu0 %2302
    %2304 = vrot.lane.b32.xlu0 %v519, 28
    %v2305 = vpop.permute.xlu0 %2304
    %2306 = vrot.lane.b32.xlu0 %v520, 28
    %v2307 = vpop.permute.xlu0 %2306
    %2308 = vrot.lane.b32.xlu0 %v521, 28
    %v2309 = vpop.permute.xlu0 %2308
    %2310 = vrot.lane.b32.xlu0 %v522, 28
    %v2311 = vpop.permute.xlu0 %2310
    %2312 = vrot.lane.b32.xlu0 %v523, 28
    %v2313 = vpop.permute.xlu0 %2312
    %2314 = vrot.lane.b32.xlu0 %v524, 28
    %v2315 = vpop.permute.xlu0 %2314
    %2316 = vrot.lane.b32.xlu0 %v525, 28
    %v2317 = vpop.permute.xlu0 %2316
    %2446 = vrot.lane.b32.xlu0 %v526, 32
    %v2447 = vpop.permute.xlu0 %2446
    %2448 = vrot.lane.b32.xlu0 %v527, 32
    %v2449 = vpop.permute.xlu0 %2448
    %2450 = vrot.lane.b32.xlu0 %v528, 32
    %v2451 = vpop.permute.xlu0 %2450
    %2452 = vrot.lane.b32.xlu0 %v529, 32
    %v2453 = vpop.permute.xlu0 %2452
    %2454 = vrot.lane.b32.xlu0 %v530, 32
    %v2455 = vpop.permute.xlu0 %2454
    %2456 = vrot.lane.b32.xlu0 %v531, 32
    %v2457 = vpop.permute.xlu0 %2456
    %2458 = vrot.lane.b32.xlu0 %v532, 32
    %v2459 = vpop.permute.xlu0 %2458
    %2460 = vrot.lane.b32.xlu0 %v533, 32
    %v2461 = vpop.permute.xlu0 %2460
    %2462 = vrot.lane.b32.xlu0 %v534, 32
    %v2463 = vpop.permute.xlu0 %2462
    %2464 = vrot.lane.b32.xlu0 %v535, 32
    %v2465 = vpop.permute.xlu0 %2464
    %2466 = vrot.lane.b32.xlu0 %v536, 32
    %v2467 = vpop.permute.xlu0 %2466
    %2468 = vrot.lane.b32.xlu0 %v537, 32
    %v2469 = vpop.permute.xlu0 %2468
    %2470 = vrot.lane.b32.xlu0 %v538, 32
    %v2471 = vpop.permute.xlu0 %2470
    %2472 = vrot.lane.b32.xlu0 %v539, 32
    %v2473 = vpop.permute.xlu0 %2472
    %2474 = vrot.lane.b32.xlu0 %v540, 32
    %v2475 = vpop.permute.xlu0 %2474
    %2476 = vrot.lane.b32.xlu0 %v541, 32
    %v2477 = vpop.permute.xlu0 %2476
    %2478 = vrot.lane.b32.xlu0 %v542, 32
    %v2479 = vpop.permute.xlu0 %2478
    %2480 = vrot.lane.b32.xlu0 %v543, 32
    %v2481 = vpop.permute.xlu0 %2480
    %2482 = vrot.lane.b32.xlu0 %v544, 32
    %v2483 = vpop.permute.xlu0 %2482
    %2484 = vrot.lane.b32.xlu0 %v545, 32
    %v2485 = vpop.permute.xlu0 %2484
    %2486 = vrot.lane.b32.xlu0 %v546, 32
    %v2487 = vpop.permute.xlu0 %2486
    %2488 = vrot.lane.b32.xlu0 %v547, 32
    %v2489 = vpop.permute.xlu0 %2488
    %2490 = vrot.lane.b32.xlu0 %v548, 32
    %v2491 = vpop.permute.xlu0 %2490
    %2492 = vrot.lane.b32.xlu0 %v549, 32
    %v2493 = vpop.permute.xlu0 %2492
    %2494 = vrot.lane.b32.xlu0 %v550, 32
    %v2495 = vpop.permute.xlu0 %2494
    %2496 = vrot.lane.b32.xlu0 %v551, 32
    %v2497 = vpop.permute.xlu0 %2496
    %2498 = vrot.lane.b32.xlu0 %v552, 32
    %v2499 = vpop.permute.xlu0 %2498
    %2500 = vrot.lane.b32.xlu0 %v553, 32
    %v2501 = vpop.permute.xlu0 %2500
    %2502 = vrot.lane.b32.xlu0 %v554, 32
    %v2503 = vpop.permute.xlu0 %2502
    %2504 = vrot.lane.b32.xlu0 %v555, 32
    %v2505 = vpop.permute.xlu0 %2504
    %2506 = vrot.lane.b32.xlu0 %v556, 32
    %v2507 = vpop.permute.xlu0 %2506
    %2508 = vrot.lane.b32.xlu0 %v557, 32
    %v2509 = vpop.permute.xlu0 %2508
    %2510 = vrot.lane.b32.xlu0 %v558, 32
    %v2511 = vpop.permute.xlu0 %2510
    %2512 = vrot.lane.b32.xlu0 %v559, 32
    %v2513 = vpop.permute.xlu0 %2512
    %2514 = vrot.lane.b32.xlu0 %v560, 32
    %v2515 = vpop.permute.xlu0 %2514
    %2516 = vrot.lane.b32.xlu0 %v561, 32
    %v2517 = vpop.permute.xlu0 %2516
    %2518 = vrot.lane.b32.xlu0 %v562, 32
    %v2519 = vpop.permute.xlu0 %2518
    %2520 = vrot.lane.b32.xlu0 %v563, 32
    %v2521 = vpop.permute.xlu0 %2520
    %2522 = vrot.lane.b32.xlu0 %v564, 32
    %v2523 = vpop.permute.xlu0 %2522
    %2524 = vrot.lane.b32.xlu0 %v565, 32
    %v2525 = vpop.permute.xlu0 %2524
    %2526 = vrot.lane.b32.xlu0 %v566, 32
    %v2527 = vpop.permute.xlu0 %2526
    %2528 = vrot.lane.b32.xlu0 %v567, 32
    %v2529 = vpop.permute.xlu0 %2528
    %2530 = vrot.lane.b32.xlu0 %v568, 32
    %v2531 = vpop.permute.xlu0 %2530
    %2532 = vrot.lane.b32.xlu0 %v569, 32
    %v2533 = vpop.permute.xlu0 %2532
    %2534 = vrot.lane.b32.xlu0 %v570, 32
    %v2535 = vpop.permute.xlu0 %2534
    %2536 = vrot.lane.b32.xlu0 %v571, 32
    %v2537 = vpop.permute.xlu0 %2536
    %2538 = vrot.lane.b32.xlu0 %v572, 32
    %v2539 = vpop.permute.xlu0 %2538
    %2540 = vrot.lane.b32.xlu0 %v573, 32
    %v2541 = vpop.permute.xlu0 %2540
    %2542 = vrot.lane.b32.xlu0 %v574, 32
    %v2543 = vpop.permute.xlu0 %2542
    %2544 = vrot.lane.b32.xlu0 %v575, 32
    %v2545 = vpop.permute.xlu0 %2544
    %2546 = vrot.lane.b32.xlu0 %v576, 32
    %v2547 = vpop.permute.xlu0 %2546
    %2548 = vrot.lane.b32.xlu0 %v577, 32
    %v2549 = vpop.permute.xlu0 %2548
    %2550 = vrot.lane.b32.xlu0 %v578, 32
    %v2551 = vpop.permute.xlu0 %2550
    %2552 = vrot.lane.b32.xlu0 %v579, 32
    %v2553 = vpop.permute.xlu0 %2552
    %2554 = vrot.lane.b32.xlu0 %v580, 32
    %v2555 = vpop.permute.xlu0 %2554
    %2556 = vrot.lane.b32.xlu0 %v581, 32
    %v2557 = vpop.permute.xlu0 %2556
    %2558 = vrot.lane.b32.xlu0 %v582, 32
    %v2559 = vpop.permute.xlu0 %2558
    %2560 = vrot.lane.b32.xlu0 %v583, 32
    %v2561 = vpop.permute.xlu0 %2560
    %2562 = vrot.lane.b32.xlu0 %v584, 32
    %v2563 = vpop.permute.xlu0 %2562
    %2564 = vrot.lane.b32.xlu0 %v585, 32
    %v2565 = vpop.permute.xlu0 %2564
    %2566 = vrot.lane.b32.xlu0 %v586, 32
    %v2567 = vpop.permute.xlu0 %2566
    %2568 = vrot.lane.b32.xlu0 %v587, 32
    %v2569 = vpop.permute.xlu0 %2568
    %2570 = vrot.lane.b32.xlu0 %v588, 32
    %v2571 = vpop.permute.xlu0 %2570
    %2572 = vrot.lane.b32.xlu0 %v589, 32
    %v2573 = vpop.permute.xlu0 %2572
    %vm2638 = vcmask 31744
    %v2639 = vsel %vm2638, %v12, %v655
    %v2640 = vsel %vm2638, %v13, %v657
    %v2641 = vsel %vm2638, %v14, %v659
    %v2642 = vsel %vm2638, %v15, %v661
    %v2643 = vsel %vm2638, %v16, %v663
    %v2644 = vsel %vm2638, %v17, %v665
    %v2645 = vsel %vm2638, %v18, %v667
    %v2646 = vsel %vm2638, %v19, %v669
    %v2647 = vsel %vm2638, %v20, %v671
    %v2648 = vsel %vm2638, %v21, %v673
    %v2649 = vsel %vm2638, %v22, %v675
    %v2650 = vsel %vm2638, %v23, %v677
    %v2651 = vsel %vm2638, %v24, %v679
    %v2652 = vsel %vm2638, %v25, %v681
    %v2653 = vsel %vm2638, %v26, %v683
    %v2654 = vsel %vm2638, %v27, %v685
    %v2655 = vsel %vm2638, %v28, %v687
    %v2656 = vsel %vm2638, %v29, %v689
    %v2657 = vsel %vm2638, %v30, %v691
    %v2658 = vsel %vm2638, %v31, %v693
    %v2659 = vsel %vm2638, %v32, %v695
    %v2660 = vsel %vm2638, %v33, %v697
    %v2661 = vsel %vm2638, %v34, %v699
    %v2662 = vsel %vm2638, %v35, %v701
    %v2663 = vsel %vm2638, %v36, %v703
    %v2664 = vsel %vm2638, %v37, %v705
    %v2665 = vsel %vm2638, %v38, %v707
    %v2666 = vsel %vm2638, %v39, %v709
    %v2667 = vsel %vm2638, %v40, %v711
    %v2668 = vsel %vm2638, %v41, %v713
    %v2669 = vsel %vm2638, %v42, %v715
    %v2670 = vsel %vm2638, %v43, %v717
    %v2671 = vsel %vm2638, %v44, %v719
    %v2672 = vsel %vm2638, %v45, %v721
    %v2673 = vsel %vm2638, %v46, %v723
    %v2674 = vsel %vm2638, %v47, %v725
    %v2675 = vsel %vm2638, %v48, %v727
    %v2676 = vsel %vm2638, %v49, %v729
    %v2677 = vsel %vm2638, %v50, %v731
    %v2678 = vsel %vm2638, %v51, %v733
    %v2679 = vsel %vm2638, %v52, %v735
    %v2680 = vsel %vm2638, %v53, %v737
    %v2681 = vsel %vm2638, %v54, %v739
    %v2682 = vsel %vm2638, %v55, %v741
    %v2683 = vsel %vm2638, %v56, %v743
    %v2684 = vsel %vm2638, %v57, %v745
    %v2685 = vsel %vm2638, %v58, %v747
    %v2686 = vsel %vm2638, %v59, %v749
    %v2687 = vsel %vm2638, %v60, %v751
    %v2688 = vsel %vm2638, %v61, %v753
    %v2689 = vsel %vm2638, %v62, %v755
    %v2690 = vsel %vm2638, %v63, %v757
    %v2691 = vsel %vm2638, %v64, %v759
    %v2692 = vsel %vm2638, %v65, %v761
    %v2693 = vsel %vm2638, %v66, %v763
    %v2694 = vsel %vm2638, %v67, %v765
    %v2695 = vsel %vm2638, %v68, %v767
    %v2696 = vsel %vm2638, %v69, %v769
    %v2697 = vsel %vm2638, %v70, %v771
    %v2698 = vsel %vm2638, %v71, %v773
    %v2699 = vsel %vm2638, %v72, %v775
    %v2700 = vsel %vm2638, %v73, %v777
    %v2701 = vsel %vm2638, %v74, %v779
    %v2702 = vsel %vm2638, %v75, %v781
    %vm2703 = vcmask 64512
    %v2704 = vsel %vm2703, %v2639, %v911
    %v2705 = vsel %vm2703, %v2640, %v913
    %v2706 = vsel %vm2703, %v2641, %v915
    %v2707 = vsel %vm2703, %v2642, %v917
    %v2708 = vsel %vm2703, %v2643, %v919
    %v2709 = vsel %vm2703, %v2644, %v921
    %v2710 = vsel %vm2703, %v2645, %v923
    %v2711 = vsel %vm2703, %v2646, %v925
    %v2712 = vsel %vm2703, %v2647, %v927
    %v2713 = vsel %vm2703, %v2648, %v929
    %v2714 = vsel %vm2703, %v2649, %v931
    %v2715 = vsel %vm2703, %v2650, %v933
    %v2716 = vsel %vm2703, %v2651, %v935
    %v2717 = vsel %vm2703, %v2652, %v937
    %v2718 = vsel %vm2703, %v2653, %v939
    %v2719 = vsel %vm2703, %v2654, %v941
    %v2720 = vsel %vm2703, %v2655, %v943
    %v2721 = vsel %vm2703, %v2656, %v945
    %v2722 = vsel %vm2703, %v2657, %v947
    %v2723 = vsel %vm2703, %v2658, %v949
    %v2724 = vsel %vm2703, %v2659, %v951
    %v2725 = vsel %vm2703, %v2660, %v953
    %v2726 = vsel %vm2703, %v2661, %v955
    %v2727 = vsel %vm2703, %v2662, %v957
    %v2728 = vsel %vm2703, %v2663, %v959
    %v2729 = vsel %vm2703, %v2664, %v961
    %v2730 = vsel %vm2703, %v2665, %v963
    %v2731 = vsel %vm2703, %v2666, %v965
    %v2732 = vsel %vm2703, %v2667, %v967
    %v2733 = vsel %vm2703, %v2668, %v969
    %v2734 = vsel %vm2703, %v2669, %v971
    %v2735 = vsel %vm2703, %v2670, %v973
    %v2736 = vsel %vm2703, %v2671, %v975
    %v2737 = vsel %vm2703, %v2672, %v977
    %v2738 = vsel %vm2703, %v2673, %v979
    %v2739 = vsel %vm2703, %v2674, %v981
    %v2740 = vsel %vm2703, %v2675, %v983
    %v2741 = vsel %vm2703, %v2676, %v985
    %v2742 = vsel %vm2703, %v2677, %v987
    %v2743 = vsel %vm2703, %v2678, %v989
    %v2744 = vsel %vm2703, %v2679, %v991
    %v2745 = vsel %vm2703, %v2680, %v993
    %v2746 = vsel %vm2703, %v2681, %v995
    %v2747 = vsel %vm2703, %v2682, %v997
    %v2748 = vsel %vm2703, %v2683, %v999
    %v2749 = vsel %vm2703, %v2684, %v1001
    %v2750 = vsel %vm2703, %v2685, %v1003
    %v2751 = vsel %vm2703, %v2686, %v1005
    %v2752 = vsel %vm2703, %v2687, %v1007
    %v2753 = vsel %vm2703, %v2688, %v1009
    %v2754 = vsel %vm2703, %v2689, %v1011
    %v2755 = vsel %vm2703, %v2690, %v1013
    %v2756 = vsel %vm2703, %v2691, %v1015
    %v2757 = vsel %vm2703, %v2692, %v1017
    %v2758 = vsel %vm2703, %v2693, %v1019
    %v2759 = vsel %vm2703, %v2694, %v1021
    %v2760 = vsel %vm2703, %v2695, %v1023
    %v2761 = vsel %vm2703, %v2696, %v1025
    %v2762 = vsel %vm2703, %v2697, %v1027
    %v2763 = vsel %vm2703, %v2698, %v1029
    %v2764 = vsel %vm2703, %v2699, %v1031
    %v2765 = vsel %vm2703, %v2700, %v1033
    %v2766 = vsel %vm2703, %v2701, %v1035
    %v2767 = vsel %vm2703, %v2702, %v1037
    %vm2768 = vcmask 97280
    %v2769 = vsel %vm2768, %v2704, %v1167
    %v2770 = vsel %vm2768, %v2705, %v1169
    %v2771 = vsel %vm2768, %v2706, %v1171
    %v2772 = vsel %vm2768, %v2707, %v1173
    %v2773 = vsel %vm2768, %v2708, %v1175
    %v2774 = vsel %vm2768, %v2709, %v1177
    %v2775 = vsel %vm2768, %v2710, %v1179
    %v2776 = vsel %vm2768, %v2711, %v1181
    %v2777 = vsel %vm2768, %v2712, %v1183
    %v2778 = vsel %vm2768, %v2713, %v1185
    %v2779 = vsel %vm2768, %v2714, %v1187
    %v2780 = vsel %vm2768, %v2715, %v1189
    %v2781 = vsel %vm2768, %v2716, %v1191
    %v2782 = vsel %vm2768, %v2717, %v1193
    %v2783 = vsel %vm2768, %v2718, %v1195
    %v2784 = vsel %vm2768, %v2719, %v1197
    %v2785 = vsel %vm2768, %v2720, %v1199
    %v2786 = vsel %vm2768, %v2721, %v1201
    %v2787 = vsel %vm2768, %v2722, %v1203
    %v2788 = vsel %vm2768, %v2723, %v1205
    %v2789 = vsel %vm2768, %v2724, %v1207
    %v2790 = vsel %vm2768, %v2725, %v1209
    %v2791 = vsel %vm2768, %v2726, %v1211
    %v2792 = vsel %vm2768, %v2727, %v1213
    %v2793 = vsel %vm2768, %v2728, %v1215
    %v2794 = vsel %vm2768, %v2729, %v1217
    %v2795 = vsel %vm2768, %v2730, %v1219
    %v2796 = vsel %vm2768, %v2731, %v1221
    %v2797 = vsel %vm2768, %v2732, %v1223
    %v2798 = vsel %vm2768, %v2733, %v1225
    %v2799 = vsel %vm2768, %v2734, %v1227
    %v2800 = vsel %vm2768, %v2735, %v1229
    %v2801 = vsel %vm2768, %v2736, %v1231
    %v2802 = vsel %vm2768, %v2737, %v1233
    %v2803 = vsel %vm2768, %v2738, %v1235
    %v2804 = vsel %vm2768, %v2739, %v1237
    %v2805 = vsel %vm2768, %v2740, %v1239
    %v2806 = vsel %vm2768, %v2741, %v1241
    %v2807 = vsel %vm2768, %v2742, %v1243
    %v2808 = vsel %vm2768, %v2743, %v1245
    %v2809 = vsel %vm2768, %v2744, %v1247
    %v2810 = vsel %vm2768, %v2745, %v1249
    %v2811 = vsel %vm2768, %v2746, %v1251
    %v2812 = vsel %vm2768, %v2747, %v1253
    %v2813 = vsel %vm2768, %v2748, %v1255
    %v2814 = vsel %vm2768, %v2749, %v1257
    %v2815 = vsel %vm2768, %v2750, %v1259
    %v2816 = vsel %vm2768, %v2751, %v1261
    %v2817 = vsel %vm2768, %v2752, %v1263
    %v2818 = vsel %vm2768, %v2753, %v1265
    %v2819 = vsel %vm2768, %v2754, %v1267
    %v2820 = vsel %vm2768, %v2755, %v1269
    %v2821 = vsel %vm2768, %v2756, %v1271
    %v2822 = vsel %vm2768, %v2757, %v1273
    %v2823 = vsel %vm2768, %v2758, %v1275
    %v2824 = vsel %vm2768, %v2759, %v1277
    %v2825 = vsel %vm2768, %v2760, %v1279
    %v2826 = vsel %vm2768, %v2761, %v1281
    %v2827 = vsel %vm2768, %v2762, %v1283
    %v2828 = vsel %vm2768, %v2763, %v1285
    %v2829 = vsel %vm2768, %v2764, %v1287
    %v2830 = vsel %vm2768, %v2765, %v1289
    %v2831 = vsel %vm2768, %v2766, %v1291
    %v2832 = vsel %vm2768, %v2767, %v1293
    %vm2833 = vcmask 130048
    %v2834 = vsel %vm2833, %v2769, %v1423
    %v2835 = vsel %vm2833, %v2770, %v1425
    %v2836 = vsel %vm2833, %v2771, %v1427
    %v2837 = vsel %vm2833, %v2772, %v1429
    %v2838 = vsel %vm2833, %v2773, %v1431
    %v2839 = vsel %vm2833, %v2774, %v1433
    %v2840 = vsel %vm2833, %v2775, %v1435
    %v2841 = vsel %vm2833, %v2776, %v1437
    %v2842 = vsel %vm2833, %v2777, %v1439
    %v2843 = vsel %vm2833, %v2778, %v1441
    %v2844 = vsel %vm2833, %v2779, %v1443
    %v2845 = vsel %vm2833, %v2780, %v1445
    %v2846 = vsel %vm2833, %v2781, %v1447
    %v2847 = vsel %vm2833, %v2782, %v1449
    %v2848 = vsel %vm2833, %v2783, %v1451
    %v2849 = vsel %vm2833, %v2784, %v1453
    %v2850 = vsel %vm2833, %v2785, %v1455
    %v2851 = vsel %vm2833, %v2786, %v1457
    %v2852 = vsel %vm2833, %v2787, %v1459
    %v2853 = vsel %vm2833, %v2788, %v1461
    %v2854 = vsel %vm2833, %v2789, %v1463
    %v2855 = vsel %vm2833, %v2790, %v1465
    %v2856 = vsel %vm2833, %v2791, %v1467
    %v2857 = vsel %vm2833, %v2792, %v1469
    %v2858 = vsel %vm2833, %v2793, %v1471
    %v2859 = vsel %vm2833, %v2794, %v1473
    %v2860 = vsel %vm2833, %v2795, %v1475
    %v2861 = vsel %vm2833, %v2796, %v1477
    %v2862 = vsel %vm2833, %v2797, %v1479
    %v2863 = vsel %vm2833, %v2798, %v1481
    %v2864 = vsel %vm2833, %v2799, %v1483
    %v2865 = vsel %vm2833, %v2800, %v1485
    %v2866 = vsel %vm2833, %v2801, %v1487
    %v2867 = vsel %vm2833, %v2802, %v1489
    %v2868 = vsel %vm2833, %v2803, %v1491
    %v2869 = vsel %vm2833, %v2804, %v1493
    %v2870 = vsel %vm2833, %v2805, %v1495
    %v2871 = vsel %vm2833, %v2806, %v1497
    %v2872 = vsel %vm2833, %v2807, %v1499
    %v2873 = vsel %vm2833, %v2808, %v1501
    %v2874 = vsel %vm2833, %v2809, %v1503
    %v2875 = vsel %vm2833, %v2810, %v1505
    %v2876 = vsel %vm2833, %v2811, %v1507
    %v2877 = vsel %vm2833, %v2812, %v1509
    %v2878 = vsel %vm2833, %v2813, %v1511
    %v2879 = vsel %vm2833, %v2814, %v1513
    %v2880 = vsel %vm2833, %v2815, %v1515
    %v2881 = vsel %vm2833, %v2816, %v1517
    %v2882 = vsel %vm2833, %v2817, %v1519
    %v2883 = vsel %vm2833, %v2818, %v1521
    %v2884 = vsel %vm2833, %v2819, %v1523
    %v2885 = vsel %vm2833, %v2820, %v1525
    %v2886 = vsel %vm2833, %v2821, %v1527
    %v2887 = vsel %vm2833, %v2822, %v1529
    %v2888 = vsel %vm2833, %v2823, %v1531
    %v2889 = vsel %vm2833, %v2824, %v1533
    %v2890 = vsel %vm2833, %v2825, %v1535
    %v2891 = vsel %vm2833, %v2826, %v1537
    %v2892 = vsel %vm2833, %v2827, %v1539
    %v2893 = vsel %vm2833, %v2828, %v1541
    %v2894 = vsel %vm2833, %v2829, %v1543
    %v2895 = vsel %vm2833, %v2830, %v1545
    %v2896 = vsel %vm2833, %v2831, %v1547
    %v2897 = vsel %vm2833, %v2832, %v1549
    %vm2898 = vcmask 162816
    %v2899 = vsel %vm2898, %v2834, %v1679
    %v2900 = vsel %vm2898, %v2835, %v1681
    %v2901 = vsel %vm2898, %v2836, %v1683
    %v2902 = vsel %vm2898, %v2837, %v1685
    %v2903 = vsel %vm2898, %v2838, %v1687
    %v2904 = vsel %vm2898, %v2839, %v1689
    %v2905 = vsel %vm2898, %v2840, %v1691
    %v2906 = vsel %vm2898, %v2841, %v1693
    %v2907 = vsel %vm2898, %v2842, %v1695
    %v2908 = vsel %vm2898, %v2843, %v1697
    %v2909 = vsel %vm2898, %v2844, %v1699
    %v2910 = vsel %vm2898, %v2845, %v1701
    %v2911 = vsel %vm2898, %v2846, %v1703
    %v2912 = vsel %vm2898, %v2847, %v1705
    %v2913 = vsel %vm2898, %v2848, %v1707
    %v2914 = vsel %vm2898, %v2849, %v1709
    %v2915 = vsel %vm2898, %v2850, %v1711
    %v2916 = vsel %vm2898, %v2851, %v1713
    %v2917 = vsel %vm2898, %v2852, %v1715
    %v2918 = vsel %vm2898, %v2853, %v1717
    %v2919 = vsel %vm2898, %v2854, %v1719
    %v2920 = vsel %vm2898, %v2855, %v1721
    %v2921 = vsel %vm2898, %v2856, %v1723
    %v2922 = vsel %vm2898, %v2857, %v1725
    %v2923 = vsel %vm2898, %v2858, %v1727
    %v2924 = vsel %vm2898, %v2859, %v1729
    %v2925 = vsel %vm2898, %v2860, %v1731
    %v2926 = vsel %vm2898, %v2861, %v1733
    %v2927 = vsel %vm2898, %v2862, %v1735
    %v2928 = vsel %vm2898, %v2863, %v1737
    %v2929 = vsel %vm2898, %v2864, %v1739
    %v2930 = vsel %vm2898, %v2865, %v1741
    %v2931 = vsel %vm2898, %v2866, %v1743
    %v2932 = vsel %vm2898, %v2867, %v1745
    %v2933 = vsel %vm2898, %v2868, %v1747
    %v2934 = vsel %vm2898, %v2869, %v1749
    %v2935 = vsel %vm2898, %v2870, %v1751
    %v2936 = vsel %vm2898, %v2871, %v1753
    %v2937 = vsel %vm2898, %v2872, %v1755
    %v2938 = vsel %vm2898, %v2873, %v1757
    %v2939 = vsel %vm2898, %v2874, %v1759
    %v2940 = vsel %vm2898, %v2875, %v1761
    %v2941 = vsel %vm2898, %v2876, %v1763
    %v2942 = vsel %vm2898, %v2877, %v1765
    %v2943 = vsel %vm2898, %v2878, %v1767
    %v2944 = vsel %vm2898, %v2879, %v1769
    %v2945 = vsel %vm2898, %v2880, %v1771
    %v2946 = vsel %vm2898, %v2881, %v1773
    %v2947 = vsel %vm2898, %v2882, %v1775
    %v2948 = vsel %vm2898, %v2883, %v1777
    %v2949 = vsel %vm2898, %v2884, %v1779
    %v2950 = vsel %vm2898, %v2885, %v1781
    %v2951 = vsel %vm2898, %v2886, %v1783
    %v2952 = vsel %vm2898, %v2887, %v1785
    %v2953 = vsel %vm2898, %v2888, %v1787
    %v2954 = vsel %vm2898, %v2889, %v1789
    %v2955 = vsel %vm2898, %v2890, %v1791
    %v2956 = vsel %vm2898, %v2891, %v1793
    %v2957 = vsel %vm2898, %v2892, %v1795
    %v2958 = vsel %vm2898, %v2893, %v1797
    %v2959 = vsel %vm2898, %v2894, %v1799
    %v2960 = vsel %vm2898, %v2895, %v1801
    %v2961 = vsel %vm2898, %v2896, %v1803
    %v2962 = vsel %vm2898, %v2897, %v1805
    %vm2963 = vcmask 195584
    %v2964 = vsel %vm2963, %v2899, %v1935
    %v2965 = vsel %vm2963, %v2900, %v1937
    %v2966 = vsel %vm2963, %v2901, %v1939
    %v2967 = vsel %vm2963, %v2902, %v1941
    %v2968 = vsel %vm2963, %v2903, %v1943
    %v2969 = vsel %vm2963, %v2904, %v1945
    %v2970 = vsel %vm2963, %v2905, %v1947
    %v2971 = vsel %vm2963, %v2906, %v1949
    %v2972 = vsel %vm2963, %v2907, %v1951
    %v2973 = vsel %vm2963, %v2908, %v1953
    %v2974 = vsel %vm2963, %v2909, %v1955
    %v2975 = vsel %vm2963, %v2910, %v1957
    %v2976 = vsel %vm2963, %v2911, %v1959
    %v2977 = vsel %vm2963, %v2912, %v1961
    %v2978 = vsel %vm2963, %v2913, %v1963
    %v2979 = vsel %vm2963, %v2914, %v1965
    %v2980 = vsel %vm2963, %v2915, %v1967
    %v2981 = vsel %vm2963, %v2916, %v1969
    %v2982 = vsel %vm2963, %v2917, %v1971
    %v2983 = vsel %vm2963, %v2918, %v1973
    %v2984 = vsel %vm2963, %v2919, %v1975
    %v2985 = vsel %vm2963, %v2920, %v1977
    %v2986 = vsel %vm2963, %v2921, %v1979
    %v2987 = vsel %vm2963, %v2922, %v1981
    %v2988 = vsel %vm2963, %v2923, %v1983
    %v2989 = vsel %vm2963, %v2924, %v1985
    %v2990 = vsel %vm2963, %v2925, %v1987
    %v2991 = vsel %vm2963, %v2926, %v1989
    %v2992 = vsel %vm2963, %v2927, %v1991
    %v2993 = vsel %vm2963, %v2928, %v1993
    %v2994 = vsel %vm2963, %v2929, %v1995
    %v2995 = vsel %vm2963, %v2930, %v1997
    %v2996 = vsel %vm2963, %v2931, %v1999
    %v2997 = vsel %vm2963, %v2932, %v2001
    %v2998 = vsel %vm2963, %v2933, %v2003
    %v2999 = vsel %vm2963, %v2934, %v2005
    %v3000 = vsel %vm2963, %v2935, %v2007
    %v3001 = vsel %vm2963, %v2936, %v2009
    %v3002 = vsel %vm2963, %v2937, %v2011
    %v3003 = vsel %vm2963, %v2938, %v2013
    %v3004 = vsel %vm2963, %v2939, %v2015
    %v3005 = vsel %vm2963, %v2940, %v2017
    %v3006 = vsel %vm2963, %v2941, %v2019
    %v3007 = vsel %vm2963, %v2942, %v2021
    %v3008 = vsel %vm2963, %v2943, %v2023
    %v3009 = vsel %vm2963, %v2944, %v2025
    %v3010 = vsel %vm2963, %v2945, %v2027
    %v3011 = vsel %vm2963, %v2946, %v2029
    %v3012 = vsel %vm2963, %v2947, %v2031
    %v3013 = vsel %vm2963, %v2948, %v2033
    %v3014 = vsel %vm2963, %v2949, %v2035
    %v3015 = vsel %vm2963, %v2950, %v2037
    %v3016 = vsel %vm2963, %v2951, %v2039
    %v3017 = vsel %vm2963, %v2952, %v2041
    %v3018 = vsel %vm2963, %v2953, %v2043
    %v3019 = vsel %vm2963, %v2954, %v2045
    %v3020 = vsel %vm2963, %v2955, %v2047
    %v3021 = vsel %vm2963, %v2956, %v2049
    %v3022 = vsel %vm2963, %v2957, %v2051
    %v3023 = vsel %vm2963, %v2958, %v2053
    %v3024 = vsel %vm2963, %v2959, %v2055
    %v3025 = vsel %vm2963, %v2960, %v2057
    %v3026 = vsel %vm2963, %v2961, %v2059
    %v3027 = vsel %vm2963, %v2962, %v2061
    %vm3028 = vcmask 228352
    %v3029 = vsel %vm3028, %v2964, %v2191
    %v3030 = vsel %vm3028, %v2965, %v2193
    %v3031 = vsel %vm3028, %v2966, %v2195
    %v3032 = vsel %vm3028, %v2967, %v2197
    %v3033 = vsel %vm3028, %v2968, %v2199
    %v3034 = vsel %vm3028, %v2969, %v2201
    %v3035 = vsel %vm3028, %v2970, %v2203
    %v3036 = vsel %vm3028, %v2971, %v2205
    %v3037 = vsel %vm3028, %v2972, %v2207
    %v3038 = vsel %vm3028, %v2973, %v2209
    %v3039 = vsel %vm3028, %v2974, %v2211
    %v3040 = vsel %vm3028, %v2975, %v2213
    %v3041 = vsel %vm3028, %v2976, %v2215
    %v3042 = vsel %vm3028, %v2977, %v2217
    %v3043 = vsel %vm3028, %v2978, %v2219
    %v3044 = vsel %vm3028, %v2979, %v2221
    %v3045 = vsel %vm3028, %v2980, %v2223
    %v3046 = vsel %vm3028, %v2981, %v2225
    %v3047 = vsel %vm3028, %v2982, %v2227
    %v3048 = vsel %vm3028, %v2983, %v2229
    %v3049 = vsel %vm3028, %v2984, %v2231
    %v3050 = vsel %vm3028, %v2985, %v2233
    %v3051 = vsel %vm3028, %v2986, %v2235
    %v3052 = vsel %vm3028, %v2987, %v2237
    %v3053 = vsel %vm3028, %v2988, %v2239
    %v3054 = vsel %vm3028, %v2989, %v2241
    %v3055 = vsel %vm3028, %v2990, %v2243
    %v3056 = vsel %vm3028, %v2991, %v2245
    %v3057 = vsel %vm3028, %v2992, %v2247
    %v3058 = vsel %vm3028, %v2993, %v2249
    %v3059 = vsel %vm3028, %v2994, %v2251
    %v3060 = vsel %vm3028, %v2995, %v2253
    %v3061 = vsel %vm3028, %v2996, %v2255
    %v3062 = vsel %vm3028, %v2997, %v2257
    %v3063 = vsel %vm3028, %v2998, %v2259
    %v3064 = vsel %vm3028, %v2999, %v2261
    %v3065 = vsel %vm3028, %v3000, %v2263
    %v3066 = vsel %vm3028, %v3001, %v2265
    %v3067 = vsel %vm3028, %v3002, %v2267
    %v3068 = vsel %vm3028, %v3003, %v2269
    %v3069 = vsel %vm3028, %v3004, %v2271
    %v3070 = vsel %vm3028, %v3005, %v2273
    %v3071 = vsel %vm3028, %v3006, %v2275
    %v3072 = vsel %vm3028, %v3007, %v2277
    %v3073 = vsel %vm3028, %v3008, %v2279
    %v3074 = vsel %vm3028, %v3009, %v2281
    %v3075 = vsel %vm3028, %v3010, %v2283
    %v3076 = vsel %vm3028, %v3011, %v2285
    %v3077 = vsel %vm3028, %v3012, %v2287
    %v3078 = vsel %vm3028, %v3013, %v2289
    %v3079 = vsel %vm3028, %v3014, %v2291
    %v3080 = vsel %vm3028, %v3015, %v2293
    %v3081 = vsel %vm3028, %v3016, %v2295
    %v3082 = vsel %vm3028, %v3017, %v2297
    %v3083 = vsel %vm3028, %v3018, %v2299
    %v3084 = vsel %vm3028, %v3019, %v2301
    %v3085 = vsel %vm3028, %v3020, %v2303
    %v3086 = vsel %vm3028, %v3021, %v2305
    %v3087 = vsel %vm3028, %v3022, %v2307
    %v3088 = vsel %vm3028, %v3023, %v2309
    %v3089 = vsel %vm3028, %v3024, %v2311
    %v3090 = vsel %vm3028, %v3025, %v2313
    %v3091 = vsel %vm3028, %v3026, %v2315
    %v3092 = vsel %vm3028, %v3027, %v2317
    %vm3093 = vcmask 261120
    %v3094 = vsel %vm3093, %v3029, %v2447
    %v3095 = vsel %vm3093, %v3030, %v2449
    %v3096 = vsel %vm3093, %v3031, %v2451
    %v3097 = vsel %vm3093, %v3032, %v2453
    %v3098 = vsel %vm3093, %v3033, %v2455
    %v3099 = vsel %vm3093, %v3034, %v2457
    %v3100 = vsel %vm3093, %v3035, %v2459
    %v3101 = vsel %vm3093, %v3036, %v2461
    %v3102 = vsel %vm3093, %v3037, %v2463
    %v3103 = vsel %vm3093, %v3038, %v2465
    %v3104 = vsel %vm3093, %v3039, %v2467
    %v3105 = vsel %vm3093, %v3040, %v2469
    %v3106 = vsel %vm3093, %v3041, %v2471
    %v3107 = vsel %vm3093, %v3042, %v2473
    %v3108 = vsel %vm3093, %v3043, %v2475
    %v3109 = vsel %vm3093, %v3044, %v2477
    %v3110 = vsel %vm3093, %v3045, %v2479
    %v3111 = vsel %vm3093, %v3046, %v2481
    %v3112 = vsel %vm3093, %v3047, %v2483
    %v3113 = vsel %vm3093, %v3048, %v2485
    %v3114 = vsel %vm3093, %v3049, %v2487
    %v3115 = vsel %vm3093, %v3050, %v2489
    %v3116 = vsel %vm3093, %v3051, %v2491
    %v3117 = vsel %vm3093, %v3052, %v2493
    %v3118 = vsel %vm3093, %v3053, %v2495
    %v3119 = vsel %vm3093, %v3054, %v2497
    %v3120 = vsel %vm3093, %v3055, %v2499
    %v3121 = vsel %vm3093, %v3056, %v2501
    %v3122 = vsel %vm3093, %v3057, %v2503
    %v3123 = vsel %vm3093, %v3058, %v2505
    %v3124 = vsel %vm3093, %v3059, %v2507
    %v3125 = vsel %vm3093, %v3060, %v2509
    %v3126 = vsel %vm3093, %v3061, %v2511
    %v3127 = vsel %vm3093, %v3062, %v2513
    %v3128 = vsel %vm3093, %v3063, %v2515
    %v3129 = vsel %vm3093, %v3064, %v2517
    %v3130 = vsel %vm3093, %v3065, %v2519
    %v3131 = vsel %vm3093, %v3066, %v2521
    %v3132 = vsel %vm3093, %v3067, %v2523
    %v3133 = vsel %vm3093, %v3068, %v2525
    %v3134 = vsel %vm3093, %v3069, %v2527
    %v3135 = vsel %vm3093, %v3070, %v2529
    %v3136 = vsel %vm3093, %v3071, %v2531
    %v3137 = vsel %vm3093, %v3072, %v2533
    %v3138 = vsel %vm3093, %v3073, %v2535
    %v3139 = vsel %vm3093, %v3074, %v2537
    %v3140 = vsel %vm3093, %v3075, %v2539
    %v3141 = vsel %vm3093, %v3076, %v2541
    %v3142 = vsel %vm3093, %v3077, %v2543
    %v3143 = vsel %vm3093, %v3078, %v2545
    %v3144 = vsel %vm3093, %v3079, %v2547
    %v3145 = vsel %vm3093, %v3080, %v2549
    %v3146 = vsel %vm3093, %v3081, %v2551
    %v3147 = vsel %vm3093, %v3082, %v2553
    %v3148 = vsel %vm3093, %v3083, %v2555
    %v3149 = vsel %vm3093, %v3084, %v2557
    %v3150 = vsel %vm3093, %v3085, %v2559
    %v3151 = vsel %vm3093, %v3086, %v2561
    %v3152 = vsel %vm3093, %v3087, %v2563
    %v3153 = vsel %vm3093, %v3088, %v2565
    %v3154 = vsel %vm3093, %v3089, %v2567
    %v3155 = vsel %vm3093, %v3090, %v2569
    %v3156 = vsel %vm3093, %v3091, %v2571
    %v3157 = vsel %vm3093, %v3092, %v2573
    %v3158 = vld [vmem:[%s1] sm:$0xff]
    %v3159 = vld [vmem:[%s1 + $0x8] sm:$0xff]
    %v3160 = vld [vmem:[%s1 + $0x10] sm:$0xff]
    %v3161 = vld [vmem:[%s1 + $0x18] sm:$0xff]
    %v3162 = vld [vmem:[%s1 + $0x20] sm:$0xf]
    %vm3163 = vcmask 293888
    %v3165 = vsel %vm3163, %v3094, 0
    %v3168 = vsel %vm3163, %v3095, 0
    %v3171 = vsel %vm3163, %v3096, 0
    %v3174 = vsel %vm3163, %v3097, 0
    %v3177 = vsel %vm3163, %v3098, 0
    %v3180 = vsel %vm3163, %v3099, 0
    %v3183 = vsel %vm3163, %v3100, 0
    %v3186 = vsel %vm3163, %v3101, 0
    %v3189 = vsel %vm3163, %v3102, 0
    %v3192 = vsel %vm3163, %v3103, 0
    %v3195 = vsel %vm3163, %v3104, 0
    %v3198 = vsel %vm3163, %v3105, 0
    %v3201 = vsel %vm3163, %v3106, 0
    %v3204 = vsel %vm3163, %v3107, 0
    %v3207 = vsel %vm3163, %v3108, 0
    %v3210 = vsel %vm3163, %v3109, 0
    %v3213 = vsel %vm3163, %v3110, 0
    %v3216 = vsel %vm3163, %v3111, 0
    %v3219 = vsel %vm3163, %v3112, 0
    %v3222 = vsel %vm3163, %v3113, 0
    %v3225 = vsel %vm3163, %v3114, 0
    %v3228 = vsel %vm3163, %v3115, 0
    %v3231 = vsel %vm3163, %v3116, 0
    %v3234 = vsel %vm3163, %v3117, 0
    %v3237 = vsel %vm3163, %v3118, 0
    %v3240 = vsel %vm3163, %v3119, 0
    %v3243 = vsel %vm3163, %v3120, 0
    %v3246 = vsel %vm3163, %v3121, 0
    %v3249 = vsel %vm3163, %v3122, 0
    %v3252 = vsel %vm3163, %v3123, 0
    %v3255 = vsel %vm3163, %v3124, 0
    %v3258 = vsel %vm3163, %v3125, 0
    %v3261 = vsel %vm3163, %v3126, 0
    %v3264 = vsel %vm3163, %v3127, 0
    %v3267 = vsel %vm3163, %v3128, 0
    %v3270 = vsel %vm3163, %v3129, 0
    %v3273 = vsel %vm3163, %v3130, 0
    %v3276 = vsel %vm3163, %v3131, 0
    %v3279 = vsel %vm3163, %v3132, 0
    %v3282 = vsel %vm3163, %v3133, 0
    %v3285 = vsel %vm3163, %v3134, 0
    %v3288 = vsel %vm3163, %v3135, 0
    %v3291 = vsel %vm3163, %v3136, 0
    %v3294 = vsel %vm3163, %v3137, 0
    %v3297 = vsel %vm3163, %v3138, 0
    %v3300 = vsel %vm3163, %v3139, 0
    %v3303 = vsel %vm3163, %v3140, 0
    %v3306 = vsel %vm3163, %v3141, 0
    %v3309 = vsel %vm3163, %v3142, 0
    %v3312 = vsel %vm3163, %v3143, 0
    %v3315 = vsel %vm3163, %v3144, 0
    %v3318 = vsel %vm3163, %v3145, 0
    %v3321 = vsel %vm3163, %v3146, 0
    %v3324 = vsel %vm3163, %v3147, 0
    %v3327 = vsel %vm3163, %v3148, 0
    %v3330 = vsel %vm3163, %v3149, 0
    %v3333 = vsel %vm3163, %v3150, 0
    %v3336 = vsel %vm3163, %v3151, 0
    %v3339 = vsel %vm3163, %v3152, 0
    %v3342 = vsel %vm3163, %v3153, 0
    %v3345 = vsel %vm3163, %v3154, 0
    %v3348 = vsel %vm3163, %v3155, 0
    %v3351 = vsel %vm3163, %v3156, 0
    %v3354 = vsel %vm3163, %v3157, 0
    %vm3356 = vcmask 1043456
    %v3358 = vsel %vm3356, %v3162, 0
    %3360 = vmatprep.subr.mxu0 0.0
    %3361 = vmatpush1.msra.mxu0 %v3158
    %3362 = vmatprep.subr.mxu0 0.0
    %3363 = vmatpush1.msra.mxu0 %v3159
    %3364 = vmatprep.subr.mxu0 0.0
    %3365 = vmatpush1.msra.mxu0 %v3160
    %3366 = vmatprep.subr.mxu0 0.0
    %3367 = vmatpush1.msra.mxu0 %v3161
    %3368 = vmatprep.subr.mxu0 0.0
    %3369 = vmatpush1.msra.mxu0 %v3358
    %3370 = vmatprep.subr.mxu0 0.0
    %3371 = vmatpush1.msra.mxu0 0.0
    %3372 = vmatprep.subr.mxu0 0.0
    %3373 = vmatpush1.msra.mxu0 0.0
    %3374 = vmatprep.subr.mxu0 0.0
    %3375 = vmatpush1.msra.mxu0 0.0
    %3376 = vmatprep.subr.mxu0 0.0
    %3377 = vmatpush1.msra.mxu0 0.0
    %3378 = vmatprep.subr.mxu0 0.0
    %3379 = vmatpush1.msra.mxu0 0.0
    %3380 = vmatprep.subr.mxu0 0.0
    %3381 = vmatpush1.msra.mxu0 0.0
    %3382 = vmatprep.subr.mxu0 0.0
    %3383 = vmatpush1.msra.mxu0 0.0
    %3384 = vmatprep.subr.mxu0 0.0
    %3385 = vmatpush1.msra.mxu0 0.0
    %3386 = vmatprep.subr.mxu0 0.0
    %3387 = vmatpush1.msra.mxu0 0.0
    %3388 = vmatprep.subr.mxu0 0.0
    %3389 = vmatpush1.msra.mxu0 0.0
    %3390 = vmatprep.subr.mxu0 0.0
    %3391 = vmatpush1.msra.mxu0 0.0
    %3392 = vmatprep.subr.mxu0 0.0
    %3393 = vmatpush1.msra.mxu0 0.0
    %3394 = vmatprep.subr.mxu0 0.0
    %3395 = vmatpush1.msra.mxu0 0.0
    %3396 = vmatprep.subr.mxu0 0.0
    %3397 = vmatpush1.msra.mxu0 0.0
    %3398 = vmatprep.subr.mxu0 0.0
    %3399 = vmatpush1.msra.mxu0 0.0
    %3400 = vmatprep.subr.mxu0 0.0
    %3401 = vmatpush1.msra.mxu0 0.0
    %3402 = vmatprep.subr.mxu0 0.0
    %3403 = vmatpush1.msra.mxu0 0.0
    %3404 = vmatprep.subr.mxu0 0.0
    %3405 = vmatpush1.msra.mxu0 0.0
    %3406 = vmatprep.subr.mxu0 0.0
    %3407 = vmatpush1.msra.mxu0 0.0
    %3408 = vmatprep.subr.mxu0 0.0
    %3409 = vmatpush1.msra.mxu0 0.0
    %3410 = vmatprep.subr.mxu0 0.0
    %3411 = vmatpush1.msra.mxu0 0.0
    %3412 = vmatprep.subr.mxu0 0.0
    %3413 = vmatpush1.msra.mxu0 0.0
    %3414 = vmatprep.subr.mxu0 0.0
    %3415 = vmatpush1.msra.mxu0 0.0
    %3416 = vmatprep.subr.mxu0 0.0
    %3417 = vmatpush1.msra.mxu0 0.0
    %3418 = vmatprep.subr.mxu0 0.0
    %3419 = vmatpush1.msra.mxu0 0.0
    %3420 = vmatprep.subr.mxu0 0.0
    %3421 = vmatpush1.msra.mxu0 0.0
    %3422 = vmatprep.subr.mxu0 0.0
    %3423 = vmatpush1.msra.mxu0 0.0
    %3424 = vmatprep.mubr.f32.mxu0 0.0
    %3425 = vmatmul.mubr.f32.gmra.mrb[0].mxu0 %v3165
    %v3426 = vpop.f32.mrb[0].mxu0
    %v3427 = vadd.f32 0.0, %v3426
    %v3428 = vpop.f32.mrb[0].mxu0
    %3429 = vmatprep.mubr.f32.mxu0 0.0
    %3430 = vmatmul.mubr.f32.gmra.mrb[0].mxu0 %v3168
    %v3431 = vpop.f32.mrb[0].mxu0
    %v3432 = vadd.f32 0.0, %v3431
    %v3433 = vpop.f32.mrb[0].mxu0
    %3434 = vmatprep.mubr.f32.mxu0 0.0
    %3435 = vmatmul.mubr.f32.gmra.mrb[0].mxu0 %v3171
    %v3436 = vpop.f32.mrb[0].mxu0
    %v3437 = vadd.f32 0.0, %v3436
    %v3438 = vpop.f32.mrb[0].mxu0
    %3439 = vmatprep.mubr.f32.mxu0 0.0
    %3440 = vmatmul.mubr.f32.gmra.mrb[0].mxu0 %v3174
    %v3441 = vpop.f32.mrb[0].mxu0
    %v3442 = vadd.f32 0.0, %v3441
    %v3443 = vpop.f32.mrb[0].mxu0
    %3444 = vmatprep.mubr.f32.mxu0 0.0
    %3445 = vmatmul.mubr.f32.gmra.mrb[0].mxu0 %v3177
    %v3446 = vpop.f32.mrb[0].mxu0
    %v3447 = vadd.f32 0.0, %v3446
    %v3448 = vpop.f32.mrb[0].mxu0
    %3449 = vmatprep.mubr.f32.mxu0 0.0
    %3450 = vmatmul.mubr.f32.gmra.mrb[0].mxu0 %v3180
    %v3451 = vpop.f32.mrb[0].mxu0
    %v3452 = vadd.f32 0.0, %v3451
    %v3453 = vpop.f32.mrb[0].mxu0
    %3454 = vmatprep.mubr.f32.mxu0 0.0
    %3455 = vmatmul.mubr.f32.gmra.mrb[0].mxu0 %v3183
    %v3456 = vpop.f32.mrb[0].mxu0
    %v3457 = vadd.f32 0.0, %v3456
    %v3458 = vpop.f32.mrb[0].mxu0
    %3459 = vmatprep.mubr.f32.mxu0 0.0
    %3460 = vmatmul.mubr.f32.gmra.mrb[0].mxu0 %v3186
    %v3461 = vpop.f32.mrb[0].mxu0
    %v3462 = vadd.f32 0.0, %v3461
    %v3463 = vpop.f32.mrb[0].mxu0
    %3464 = vmatprep.mubr.f32.mxu0 0.0
    %3465 = vmatmul.mubr.f32.gmra.mrb[0].mxu0 %v3189
    %v3466 = vpop.f32.mrb[0].mxu0
    %v3467 = vadd.f32 0.0, %v3466
    %v3468 = vpop.f32.mrb[0].mxu0
    %3469 = vmatprep.mubr.f32.mxu0 0.0
    %3470 = vmatmul.mubr.f32.gmra.mrb[0].mxu0 %v3192
    %v3471 = vpop.f32.mrb[0].mxu0
    %v3472 = vadd.f32 0.0, %v3471
    %v3473 = vpop.f32.mrb[0].mxu0
    %3474 = vmatprep.mubr.f32.mxu0 0.0
    %3475 = vmatmul.mubr.f32.gmra.mrb[0].mxu0 %v3195
    %v3476 = vpop.f32.mrb[0].mxu0
    %v3477 = vadd.f32 0.0, %v3476
    %v3478 = vpop.f32.mrb[0].mxu0
    %3479 = vmatprep.mubr.f32.mxu0 0.0
    %3480 = vmatmul.mubr.f32.gmra.mrb[0].mxu0 %v3198
    %v3481 = vpop.f32.mrb[0].mxu0
    %v3482 = vadd.f32 0.0, %v3481
    %v3483 = vpop.f32.mrb[0].mxu0
    %3484 = vmatprep.mubr.f32.mxu0 0.0
    %3485 = vmatmul.mubr.f32.gmra.mrb[0].mxu0 %v3201
    %v3486 = vpop.f32.mrb[0].mxu0
    %v3487 = vadd.f32 0.0, %v3486
    %v3488 = vpop.f32.mrb[0].mxu0
    %3489 = vmatprep.mubr.f32.mxu0 0.0
    %3490 = vmatmul.mubr.f32.gmra.mrb[0].mxu0 %v3204
    %v3491 = vpop.f32.mrb[0].mxu0
    %v3492 = vadd.f32 0.0, %v3491
    %v3493 = vpop.f32.mrb[0].mxu0
    %3494 = vmatprep.mubr.f32.mxu0 0.0
    %3495 = vmatmul.mubr.f32.gmra.mrb[0].mxu0 %v3207
    %v3496 = vpop.f32.mrb[0].mxu0
    %v3497 = vadd.f32 0.0, %v3496
    %v3498 = vpop.f32.mrb[0].mxu0
    %3499 = vmatprep.mubr.f32.mxu0 0.0
    %3500 = vmatmul.mubr.f32.gmra.mrb[0].mxu0 %v3210
    %v3501 = vpop.f32.mrb[0].mxu0
    %v3502 = vadd.f32 0.0, %v3501
    %v3503 = vpop.f32.mrb[0].mxu0
    %3504 = vmatprep.mubr.f32.mxu0 0.0
    %3505 = vmatmul.mubr.f32.gmra.mrb[0].mxu0 %v3213
    %v3506 = vpop.f32.mrb[0].mxu0
    %v3507 = vadd.f32 0.0, %v3506
    %v3508 = vpop.f32.mrb[0].mxu0
    %3509 = vmatprep.mubr.f32.mxu0 0.0
    %3510 = vmatmul.mubr.f32.gmra.mrb[0].mxu0 %v3216
    %v3511 = vpop.f32.mrb[0].mxu0
    %v3512 = vadd.f32 0.0, %v3511
    %v3513 = vpop.f32.mrb[0].mxu0
    %3514 = vmatprep.mubr.f32.mxu0 0.0
    %3515 = vmatmul.mubr.f32.gmra.mrb[0].mxu0 %v3219
    %v3516 = vpop.f32.mrb[0].mxu0
    %v3517 = vadd.f32 0.0, %v3516
    %v3518 = vpop.f32.mrb[0].mxu0
    %3519 = vmatprep.mubr.f32.mxu0 0.0
    %3520 = vmatmul.mubr.f32.gmra.mrb[0].mxu0 %v3222
    %v3521 = vpop.f32.mrb[0].mxu0
    %v3522 = vadd.f32 0.0, %v3521
    %v3523 = vpop.f32.mrb[0].mxu0
    %3524 = vmatprep.mubr.f32.mxu0 0.0
    %3525 = vmatmul.mubr.f32.gmra.mrb[0].mxu0 %v3225
    %v3526 = vpop.f32.mrb[0].mxu0
    %v3527 = vadd.f32 0.0, %v3526
    %v3528 = vpop.f32.mrb[0].mxu0
    %3529 = vmatprep.mubr.f32.mxu0 0.0
    %3530 = vmatmul.mubr.f32.gmra.mrb[0].mxu0 %v3228
    %v3531 = vpop.f32.mrb[0].mxu0
    %v3532 = vadd.f32 0.0, %v3531
    %v3533 = vpop.f32.mrb[0].mxu0
    %3534 = vmatprep.mubr.f32.mxu0 0.0
    %3535 = vmatmul.mubr.f32.gmra.mrb[0].mxu0 %v3231
    %v3536 = vpop.f32.mrb[0].mxu0
    %v3537 = vadd.f32 0.0, %v3536
    %v3538 = vpop.f32.mrb[0].mxu0
    %3539 = vmatprep.mubr.f32.mxu0 0.0
    %3540 = vmatmul.mubr.f32.gmra.mrb[0].mxu0 %v3234
    %v3541 = vpop.f32.mrb[0].mxu0
    %v3542 = vadd.f32 0.0, %v3541
    %v3543 = vpop.f32.mrb[0].mxu0
    %3544 = vmatprep.mubr.f32.mxu0 0.0
    %3545 = vmatmul.mubr.f32.gmra.mrb[0].mxu0 %v3237
    %v3546 = vpop.f32.mrb[0].mxu0
    %v3547 = vadd.f32 0.0, %v3546
    %v3548 = vpop.f32.mrb[0].mxu0
    %3549 = vmatprep.mubr.f32.mxu0 0.0
    %3550 = vmatmul.mubr.f32.gmra.mrb[0].mxu0 %v3240
    %v3551 = vpop.f32.mrb[0].mxu0
    %v3552 = vadd.f32 0.0, %v3551
    %v3553 = vpop.f32.mrb[0].mxu0
    %3554 = vmatprep.mubr.f32.mxu0 0.0
    %3555 = vmatmul.mubr.f32.gmra.mrb[0].mxu0 %v3243
    %v3556 = vpop.f32.mrb[0].mxu0
    %v3557 = vadd.f32 0.0, %v3556
    %v3558 = vpop.f32.mrb[0].mxu0
    %3559 = vmatprep.mubr.f32.mxu0 0.0
    %3560 = vmatmul.mubr.f32.gmra.mrb[0].mxu0 %v3246
    %v3561 = vpop.f32.mrb[0].mxu0
    %v3562 = vadd.f32 0.0, %v3561
    %v3563 = vpop.f32.mrb[0].mxu0
    %3564 = vmatprep.mubr.f32.mxu0 0.0
    %3565 = vmatmul.mubr.f32.gmra.mrb[0].mxu0 %v3249
    %v3566 = vpop.f32.mrb[0].mxu0
    %v3567 = vadd.f32 0.0, %v3566
    %v3568 = vpop.f32.mrb[0].mxu0
    %3569 = vmatprep.mubr.f32.mxu0 0.0
    %3570 = vmatmul.mubr.f32.gmra.mrb[0].mxu0 %v3252
    %v3571 = vpop.f32.mrb[0].mxu0
    %v3572 = vadd.f32 0.0, %v3571
    %v3573 = vpop.f32.mrb[0].mxu0
    %3574 = vmatprep.mubr.f32.mxu0 0.0
    %3575 = vmatmul.mubr.f32.gmra.mrb[0].mxu0 %v3255
    %v3576 = vpop.f32.mrb[0].mxu0
    %v3577 = vadd.f32 0.0, %v3576
    %v3578 = vpop.f32.mrb[0].mxu0
    %3579 = vmatprep.mubr.f32.mxu0 0.0
    %3580 = vmatmul.mubr.f32.gmra.mrb[0].mxu0 %v3258
    %v3581 = vpop.f32.mrb[0].mxu0
    %v3582 = vadd.f32 0.0, %v3581
    %v3583 = vpop.f32.mrb[0].mxu0
    %3584 = vmatprep.mubr.f32.mxu0 0.0
    %3585 = vmatmul.mubr.f32.gmra.mrb[0].mxu0 %v3261
    %v3586 = vpop.f32.mrb[0].mxu0
    %v3587 = vadd.f32 0.0, %v3586
    %v3588 = vpop.f32.mrb[0].mxu0
    %3589 = vmatprep.mubr.f32.mxu0 0.0
    %3590 = vmatmul.mubr.f32.gmra.mrb[0].mxu0 %v3264
    %v3591 = vpop.f32.mrb[0].mxu0
    %v3592 = vadd.f32 0.0, %v3591
    %v3593 = vpop.f32.mrb[0].mxu0
    %3594 = vmatprep.mubr.f32.mxu0 0.0
    %3595 = vmatmul.mubr.f32.gmra.mrb[0].mxu0 %v3267
    %v3596 = vpop.f32.mrb[0].mxu0
    %v3597 = vadd.f32 0.0, %v3596
    %v3598 = vpop.f32.mrb[0].mxu0
    %3599 = vmatprep.mubr.f32.mxu0 0.0
    %3600 = vmatmul.mubr.f32.gmra.mrb[0].mxu0 %v3270
    %v3601 = vpop.f32.mrb[0].mxu0
    %v3602 = vadd.f32 0.0, %v3601
    %v3603 = vpop.f32.mrb[0].mxu0
    %3604 = vmatprep.mubr.f32.mxu0 0.0
    %3605 = vmatmul.mubr.f32.gmra.mrb[0].mxu0 %v3273
    %v3606 = vpop.f32.mrb[0].mxu0
    %v3607 = vadd.f32 0.0, %v3606
    %v3608 = vpop.f32.mrb[0].mxu0
    %3609 = vmatprep.mubr.f32.mxu0 0.0
    %3610 = vmatmul.mubr.f32.gmra.mrb[0].mxu0 %v3276
    %v3611 = vpop.f32.mrb[0].mxu0
    %v3612 = vadd.f32 0.0, %v3611
    %v3613 = vpop.f32.mrb[0].mxu0
    %3614 = vmatprep.mubr.f32.mxu0 0.0
    %3615 = vmatmul.mubr.f32.gmra.mrb[0].mxu0 %v3279
    %v3616 = vpop.f32.mrb[0].mxu0
    %v3617 = vadd.f32 0.0, %v3616
    %v3618 = vpop.f32.mrb[0].mxu0
    %3619 = vmatprep.mubr.f32.mxu0 0.0
    %3620 = vmatmul.mubr.f32.gmra.mrb[0].mxu0 %v3282
    %v3621 = vpop.f32.mrb[0].mxu0
    %v3622 = vadd.f32 0.0, %v3621
    %v3623 = vpop.f32.mrb[0].mxu0
    %3624 = vmatprep.mubr.f32.mxu0 0.0
    %3625 = vmatmul.mubr.f32.gmra.mrb[0].mxu0 %v3285
    %v3626 = vpop.f32.mrb[0].mxu0
    %v3627 = vadd.f32 0.0, %v3626
    %v3628 = vpop.f32.mrb[0].mxu0
    %3629 = vmatprep.mubr.f32.mxu0 0.0
    %3630 = vmatmul.mubr.f32.gmra.mrb[0].mxu0 %v3288
    %v3631 = vpop.f32.mrb[0].mxu0
    %v3632 = vadd.f32 0.0, %v3631
    %v3633 = vpop.f32.mrb[0].mxu0
    %3634 = vmatprep.mubr.f32.mxu0 0.0
    %3635 = vmatmul.mubr.f32.gmra.mrb[0].mxu0 %v3291
    %v3636 = vpop.f32.mrb[0].mxu0
    %v3637 = vadd.f32 0.0, %v3636
    %v3638 = vpop.f32.mrb[0].mxu0
    %3639 = vmatprep.mubr.f32.mxu0 0.0
    %3640 = vmatmul.mubr.f32.gmra.mrb[0].mxu0 %v3294
    %v3641 = vpop.f32.mrb[0].mxu0
    %v3642 = vadd.f32 0.0, %v3641
    %v3643 = vpop.f32.mrb[0].mxu0
    %3644 = vmatprep.mubr.f32.mxu0 0.0
    %3645 = vmatmul.mubr.f32.gmra.mrb[0].mxu0 %v3297
    %v3646 = vpop.f32.mrb[0].mxu0
    %v3647 = vadd.f32 0.0, %v3646
    %v3648 = vpop.f32.mrb[0].mxu0
    %3649 = vmatprep.mubr.f32.mxu0 0.0
    %3650 = vmatmul.mubr.f32.gmra.mrb[0].mxu0 %v3300
    %v3651 = vpop.f32.mrb[0].mxu0
    %v3652 = vadd.f32 0.0, %v3651
    %v3653 = vpop.f32.mrb[0].mxu0
    %3654 = vmatprep.mubr.f32.mxu0 0.0
    %3655 = vmatmul.mubr.f32.gmra.mrb[0].mxu0 %v3303
    %v3656 = vpop.f32.mrb[0].mxu0
    %v3657 = vadd.f32 0.0, %v3656
    %v3658 = vpop.f32.mrb[0].mxu0
    %3659 = vmatprep.mubr.f32.mxu0 0.0
    %3660 = vmatmul.mubr.f32.gmra.mrb[0].mxu0 %v3306
    %v3661 = vpop.f32.mrb[0].mxu0
    %v3662 = vadd.f32 0.0, %v3661
    %v3663 = vpop.f32.mrb[0].mxu0
    %3664 = vmatprep.mubr.f32.mxu0 0.0
    %3665 = vmatmul.mubr.f32.gmra.mrb[0].mxu0 %v3309
    %v3666 = vpop.f32.mrb[0].mxu0
    %v3667 = vadd.f32 0.0, %v3666
    %v3668 = vpop.f32.mrb[0].mxu0
    %3669 = vmatprep.mubr.f32.mxu0 0.0
    %3670 = vmatmul.mubr.f32.gmra.mrb[0].mxu0 %v3312
    %v3671 = vpop.f32.mrb[0].mxu0
    %v3672 = vadd.f32 0.0, %v3671
    %v3673 = vpop.f32.mrb[0].mxu0
    %3674 = vmatprep.mubr.f32.mxu0 0.0
    %3675 = vmatmul.mubr.f32.gmra.mrb[0].mxu0 %v3315
    %v3676 = vpop.f32.mrb[0].mxu0
    %v3677 = vadd.f32 0.0, %v3676
    %v3678 = vpop.f32.mrb[0].mxu0
    %3679 = vmatprep.mubr.f32.mxu0 0.0
    %3680 = vmatmul.mubr.f32.gmra.mrb[0].mxu0 %v3318
    %v3681 = vpop.f32.mrb[0].mxu0
    %v3682 = vadd.f32 0.0, %v3681
    %v3683 = vpop.f32.mrb[0].mxu0
    %3684 = vmatprep.mubr.f32.mxu0 0.0
    %3685 = vmatmul.mubr.f32.gmra.mrb[0].mxu0 %v3321
    %v3686 = vpop.f32.mrb[0].mxu0
    %v3687 = vadd.f32 0.0, %v3686
    %v3688 = vpop.f32.mrb[0].mxu0
    %3689 = vmatprep.mubr.f32.mxu0 0.0
    %3690 = vmatmul.mubr.f32.gmra.mrb[0].mxu0 %v3324
    %v3691 = vpop.f32.mrb[0].mxu0
    %v3692 = vadd.f32 0.0, %v3691
    %v3693 = vpop.f32.mrb[0].mxu0
    %3694 = vmatprep.mubr.f32.mxu0 0.0
    %3695 = vmatmul.mubr.f32.gmra.mrb[0].mxu0 %v3327
    %v3696 = vpop.f32.mrb[0].mxu0
    %v3697 = vadd.f32 0.0, %v3696
    %v3698 = vpop.f32.mrb[0].mxu0
    %3699 = vmatprep.mubr.f32.mxu0 0.0
    %3700 = vmatmul.mubr.f32.gmra.mrb[0].mxu0 %v3330
    %v3701 = vpop.f32.mrb[0].mxu0
    %v3702 = vadd.f32 0.0, %v3701
    %v3703 = vpop.f32.mrb[0].mxu0
    %3704 = vmatprep.mubr.f32.mxu0 0.0
    %3705 = vmatmul.mubr.f32.gmra.mrb[0].mxu0 %v3333
    %v3706 = vpop.f32.mrb[0].mxu0
    %v3707 = vadd.f32 0.0, %v3706
    %v3708 = vpop.f32.mrb[0].mxu0
    %3709 = vmatprep.mubr.f32.mxu0 0.0
    %3710 = vmatmul.mubr.f32.gmra.mrb[0].mxu0 %v3336
    %v3711 = vpop.f32.mrb[0].mxu0
    %v3712 = vadd.f32 0.0, %v3711
    %v3713 = vpop.f32.mrb[0].mxu0
    %3714 = vmatprep.mubr.f32.mxu0 0.0
    %3715 = vmatmul.mubr.f32.gmra.mrb[0].mxu0 %v3339
    %v3716 = vpop.f32.mrb[0].mxu0
    %v3717 = vadd.f32 0.0, %v3716
    %v3718 = vpop.f32.mrb[0].mxu0
    %3719 = vmatprep.mubr.f32.mxu0 0.0
    %3720 = vmatmul.mubr.f32.gmra.mrb[0].mxu0 %v3342
    %v3721 = vpop.f32.mrb[0].mxu0
    %v3722 = vadd.f32 0.0, %v3721
    %v3723 = vpop.f32.mrb[0].mxu0
    %3724 = vmatprep.mubr.f32.mxu0 0.0
    %3725 = vmatmul.mubr.f32.gmra.mrb[0].mxu0 %v3345
    %v3726 = vpop.f32.mrb[0].mxu0
    %v3727 = vadd.f32 0.0, %v3726
    %v3728 = vpop.f32.mrb[0].mxu0
    %3729 = vmatprep.mubr.f32.mxu0 0.0
    %3730 = vmatmul.mubr.f32.gmra.mrb[0].mxu0 %v3348
    %v3731 = vpop.f32.mrb[0].mxu0
    %v3732 = vadd.f32 0.0, %v3731
    %v3733 = vpop.f32.mrb[0].mxu0
    %3734 = vmatprep.mubr.f32.mxu0 0.0
    %3735 = vmatmul.mubr.f32.gmra.mrb[0].mxu0 %v3351
    %v3736 = vpop.f32.mrb[0].mxu0
    %v3737 = vadd.f32 0.0, %v3736
    %v3738 = vpop.f32.mrb[0].mxu0
    %3739 = vmatprep.mubr.f32.mxu0 0.0
    %3740 = vmatmul.mubr.f32.gmra.mrb[0].mxu0 %v3354
    %v3741 = vpop.f32.mrb[0].mxu0
    %v3742 = vadd.f32 0.0, %v3741
    %v3743 = vpop.f32.mrb[0].mxu0
    %3744 = vdwg.mxu0
    %v3745 = vmax.f32 %v3427, 0.0
    %v3746 = vmax.f32 %v3432, 0.0
    %v3747 = vmax.f32 %v3437, 0.0
    %v3748 = vmax.f32 %v3442, 0.0
    %v3749 = vmax.f32 %v3447, 0.0
    %v3750 = vmax.f32 %v3452, 0.0
    %v3751 = vmax.f32 %v3457, 0.0
    %v3752 = vmax.f32 %v3462, 0.0
    %v3753 = vmax.f32 %v3467, 0.0
    %v3754 = vmax.f32 %v3472, 0.0
    %v3755 = vmax.f32 %v3477, 0.0
    %v3756 = vmax.f32 %v3482, 0.0
    %v3757 = vmax.f32 %v3487, 0.0
    %v3758 = vmax.f32 %v3492, 0.0
    %v3759 = vmax.f32 %v3497, 0.0
    %v3760 = vmax.f32 %v3502, 0.0
    %v3761 = vmax.f32 %v3507, 0.0
    %v3762 = vmax.f32 %v3512, 0.0
    %v3763 = vmax.f32 %v3517, 0.0
    %v3764 = vmax.f32 %v3522, 0.0
    %v3765 = vmax.f32 %v3527, 0.0
    %v3766 = vmax.f32 %v3532, 0.0
    %v3767 = vmax.f32 %v3537, 0.0
    %v3768 = vmax.f32 %v3542, 0.0
    %v3769 = vmax.f32 %v3547, 0.0
    %v3770 = vmax.f32 %v3552, 0.0
    %v3771 = vmax.f32 %v3557, 0.0
    %v3772 = vmax.f32 %v3562, 0.0
    %v3773 = vmax.f32 %v3567, 0.0
    %v3774 = vmax.f32 %v3572, 0.0
    %v3775 = vmax.f32 %v3577, 0.0
    %v3776 = vmax.f32 %v3582, 0.0
    %v3777 = vmax.f32 %v3587, 0.0
    %v3778 = vmax.f32 %v3592, 0.0
    %v3779 = vmax.f32 %v3597, 0.0
    %v3780 = vmax.f32 %v3602, 0.0
    %v3781 = vmax.f32 %v3607, 0.0
    %v3782 = vmax.f32 %v3612, 0.0
    %v3783 = vmax.f32 %v3617, 0.0
    %v3784 = vmax.f32 %v3622, 0.0
    %v3785 = vmax.f32 %v3627, 0.0
    %v3786 = vmax.f32 %v3632, 0.0
    %v3787 = vmax.f32 %v3637, 0.0
    %v3788 = vmax.f32 %v3642, 0.0
    %v3789 = vmax.f32 %v3647, 0.0
    %v3790 = vmax.f32 %v3652, 0.0
    %v3791 = vmax.f32 %v3657, 0.0
    %v3792 = vmax.f32 %v3662, 0.0
    %v3793 = vmax.f32 %v3667, 0.0
    %v3794 = vmax.f32 %v3672, 0.0
    %v3795 = vmax.f32 %v3677, 0.0
    %v3796 = vmax.f32 %v3682, 0.0
    %v3797 = vmax.f32 %v3687, 0.0
    %v3798 = vmax.f32 %v3692, 0.0
    %v3799 = vmax.f32 %v3697, 0.0
    %v3800 = vmax.f32 %v3702, 0.0
    %v3801 = vmax.f32 %v3707, 0.0
    %v3802 = vmax.f32 %v3712, 0.0
    %v3803 = vmax.f32 %v3717, 0.0
    %v3804 = vmax.f32 %v3722, 0.0
    %v3805 = vmax.f32 %v3727, 0.0
    %v3806 = vmax.f32 %v3732, 0.0
    %v3807 = vmax.f32 %v3737, 0.0
    %v3808 = vmax.f32 %v3742, 0.0
    %3809 = vst [vmem:[#allocation2] sm:$0xff] %v3745
    %3810 = vst [vmem:[#allocation2 + $0x8] sm:$0xff] %v3746
    %3811 = vst [vmem:[#allocation2 + $0x10] sm:$0xff] %v3747
    %3812 = vst [vmem:[#allocation2 + $0x18] sm:$0xff] %v3748
    %3813 = vst [vmem:[#allocation2 + $0x20] sm:$0xff] %v3749
    %3814 = vst [vmem:[#allocation2 + $0x28] sm:$0xff] %v3750
    %3815 = vst [vmem:[#allocation2 + $0x30] sm:$0xff] %v3751
    %3816 = vst [vmem:[#allocation2 + $0x38] sm:$0xff] %v3752
    %3817 = vst [vmem:[#allocation2 + $0x40] sm:$0xff] %v3753
    %3818 = vst [vmem:[#allocation2 + $0x48] sm:$0xff] %v3754
    %3819 = vst [vmem:[#allocation2 + $0x50] sm:$0xff] %v3755
    %3820 = vst [vmem:[#allocation2 + $0x58] sm:$0xff] %v3756
    %3821 = vst [vmem:[#allocation2 + $0x60] sm:$0xff] %v3757
    %3822 = vst [vmem:[#allocation2 + $0x68] sm:$0xff] %v3758
    %3823 = vst [vmem:[#allocation2 + $0x70] sm:$0xff] %v3759
    %3824 = vst [vmem:[#allocation2 + $0x78] sm:$0xff] %v3760
    %3825 = vst [vmem:[#allocation2 + $0x80] sm:$0xff] %v3761
    %3826 = vst [vmem:[#allocation2 + $0x88] sm:$0xff] %v3762
    %3827 = vst [vmem:[#allocation2 + $0x90] sm:$0xff] %v3763
    %3828 = vst [vmem:[#allocation2 + $0x98] sm:$0xff] %v3764
    %3829 = vst [vmem:[#allocation2 + $0xa0] sm:$0xff] %v3765
    %3830 = vst [vmem:[#allocation2 + $0xa8] sm:$0xff] %v3766
    %3831 = vst [vmem:[#allocation2 + $0xb0] sm:$0xff] %v3767
    %3832 = vst [vmem:[#allocation2 + $0xb8] sm:$0xff] %v3768
    %3833 = vst [vmem:[#allocation2 + $0xc0] sm:$0xff] %v3769
    %3834 = vst [vmem:[#allocation2 + $0xc8] sm:$0xff] %v3770
    %3835 = vst [vmem:[#allocation2 + $0xd0] sm:$0xff] %v3771
    %3836 = vst [vmem:[#allocation2 + $0xd8] sm:$0xff] %v3772
    %3837 = vst [vmem:[#allocation2 + $0xe0] sm:$0xff] %v3773
    %3838 = vst [vmem:[#allocation2 + $0xe8] sm:$0xff] %v3774
    %3839 = vst [vmem:[#allocation2 + $0xf0] sm:$0xff] %v3775
    %3840 = vst [vmem:[#allocation2 + $0xf8] sm:$0xff] %v3776
    %3841 = vst [vmem:[#allocation2 + $0x100] sm:$0xff] %v3777
    %3842 = vst [vmem:[#allocation2 + $0x108] sm:$0xff] %v3778
    %3843 = vst [vmem:[#allocation2 + $0x110] sm:$0xff] %v3779
    %3844 = vst [vmem:[#allocation2 + $0x118] sm:$0xff] %v3780
    %3845 = vst [vmem:[#allocation2 + $0x120] sm:$0xff] %v3781
    %3846 = vst [vmem:[#allocation2 + $0x128] sm:$0xff] %v3782
    %3847 = vst [vmem:[#allocation2 + $0x130] sm:$0xff] %v3783
    %3848 = vst [vmem:[#allocation2 + $0x138] sm:$0xff] %v3784
    %3849 = vst [vmem:[#allocation2 + $0x140] sm:$0xff] %v3785
    %3850 = vst [vmem:[#allocation2 + $0x148] sm:$0xff] %v3786
    %3851 = vst [vmem:[#allocation2 + $0x150] sm:$0xff] %v3787
    %3852 = vst [vmem:[#allocation2 + $0x158] sm:$0xff] %v3788
    %3853 = vst [vmem:[#allocation2 + $0x160] sm:$0xff] %v3789
    %3854 = vst [vmem:[#allocation2 + $0x168] sm:$0xff] %v3790
    %3855 = vst [vmem:[#allocation2 + $0x170] sm:$0xff] %v3791
    %3856 = vst [vmem:[#allocation2 + $0x178] sm:$0xff] %v3792
    %3857 = vst [vmem:[#allocation2 + $0x180] sm:$0xff] %v3793
    %3858 = vst [vmem:[#allocation2 + $0x188] sm:$0xff] %v3794
    %3859 = vst [vmem:[#allocation2 + $0x190] sm:$0xff] %v3795
    %3860 = vst [vmem:[#allocation2 + $0x198] sm:$0xff] %v3796
    %3861 = vst [vmem:[#allocation2 + $0x1a0] sm:$0xff] %v3797
    %3862 = vst [vmem:[#allocation2 + $0x1a8] sm:$0xff] %v3798
    %3863 = vst [vmem:[#allocation2 + $0x1b0] sm:$0xff] %v3799
    %3864 = vst [vmem:[#allocation2 + $0x1b8] sm:$0xff] %v3800
    %3865 = vst [vmem:[#allocation2 + $0x1c0] sm:$0xff] %v3801
    %3866 = vst [vmem:[#allocation2 + $0x1c8] sm:$0xff] %v3802
    %3867 = vst [vmem:[#allocation2 + $0x1d0] sm:$0xff] %v3803
    %3868 = vst [vmem:[#allocation2 + $0x1d8] sm:$0xff] %v3804
    %3869 = vst [vmem:[#allocation2 + $0x1e0] sm:$0xff] %v3805
    %3870 = vst [vmem:[#allocation2 + $0x1e8] sm:$0xff] %v3806
    %3871 = vst [vmem:[#allocation2 + $0x1f0] sm:$0xff] %v3807
    %3872 = vst [vmem:[#allocation2 + $0x1f8] sm:$0xff] %v3808
    // Predicated region
    $region10: #{tpu_custom_call.1} parent=1 // pred_check
      _
    $region11: #{tpu_custom_call.1} parent=1 // pred_check_branch
      %3874 = sbr.rel (0) target = $region13
    $region12: #{tpu_custom_call.1} parent=1 // pred_region
      %s3876 = ssub.s32 8192, 8192
      %3877 = vsyncadd [#allocation3], %s3876
      %s3878 = sshll.u32 [#allocation2], 4
      %s3879 = int_to_ptr.vmem [resolvable:$true] %s3878
      %3884 = dma.vmem_to_hbm [thread:$0]  %s3879, 8192, %s2, [#allocation3], 128, 128, 8
    $region13: #{tpu_custom_call.1} parent=1 // pred_fallthru
      _
    // Predicated region
    $region14: #{tpu_custom_call.1} parent=1 // pred_check
      _
    $region15: #{tpu_custom_call.1} parent=1 // pred_check_branch
      %3886 = sbr.rel (0) target = $region17
    $region16: #{tpu_custom_call.1} parent=1 // pred_region
      %3887 = dma.done [#allocation3], 8192
    $region17: #{tpu_custom_call.1} parent=1 // pred_fallthru
      _
    %3888 = vsyncpa [#allocation3], 1

</llo_original>
